<compile_context>
chip_gen: v5e
topology: v5e:2x2
jax: 0.10.0
libtpu: 0.0.40
codegen_flags: <defaults>
</compile_context>

<pallas_src>
import jax
import jax.numpy as jnp
from jax import lax
from jax.experimental import pallas as pl
from jax.experimental.pallas import tpu as pltpu


# ----------------------------- Pallas kernel -------------------------------
def multimodal_kernel(x_img_ref, x_vis_ref,
                      w_ei_ref, b_ei_ref,        # img stand-in encoder: C_img -> 2048
                      w_ev_ref, b_ev_ref,        # vis stand-in encoder: C_vis -> 256
                      w_ih_t_ref,                # folded img head, transposed: [9, 2048]
                      w_vh_t_ref,                # visit head, transposed:      [9, 256]
                      b_head_ref,                # folded head bias: [1, 9]
                      out_ref):
    # ---- image branch: lane-axis GAP (f32) + MXU projection ------------------
    gap_img = jnp.mean(x_img_ref[...].astype(jnp.float32), axis=-1)   # [bB, C_img]
    feat_img = jnp.dot(gap_img.astype(w_ei_ref.dtype), w_ei_ref[...],
                       preferred_element_type=jnp.float32) + b_ei_ref[...]   # [bB, 2048] f32
    # nn.Dropout(0.5) in eval mode == identity.

    # ---- visit branch ---------------------------------------------------------
    gap_vis = jnp.mean(x_vis_ref[...].astype(jnp.float32), axis=-1)   # [bB, C_vis]
    f_vis = jnp.dot(gap_vis.astype(w_ev_ref.dtype), w_ev_ref[...],
                    preferred_element_type=jnp.float32) + b_ev_ref[...]      # [bB, 256] f32

    # ---- head: img_fc folded into cls; weights transposed & lane-dense -------
    # Contract the feature axis (dim 1 of both operands): [bB, D] x [9, D] -> [bB, 9]
    dn = (((1,), (1,)), ((), ()))
    logits = (lax.dot_general(feat_img.astype(w_ih_t_ref.dtype), w_ih_t_ref[...], dn,
                              preferred_element_type=jnp.float32)
              + lax.dot_general(f_vis.astype(w_vh_t_ref.dtype), w_vh_t_ref[...], dn,
                                preferred_element_type=jnp.float32)
              + b_head_ref[...])                                             # [bB, 9]
    out_ref[...] = logits.astype(out_ref.dtype)


# ------------------------- offline parameter folding ------------------------
def fold_head_params(p):
    """Fold img_fc into cls (exact in eval mode: dropout=id, no nonlinearity).

    Head weights are returned TRANSPOSED ([n_cls, feat]) so the long feature
    axis lands on the lane dimension inside the kernel (dense vregs, dense DMA).
    """
    hi = jax.lax.Precision.HIGHEST
    d_fc = p["w_fc"].shape[1]                      # 256
    w_cls_img = p["w_cls"][:d_fc, :]               # rows paired with image features
    w_cls_vis = p["w_cls"][d_fc:, :]               # rows paired with visit features
    return {
        "w_ei": p["w_ei"], "b_ei": p["b_ei"],
        "w_ev": p["w_ev"], "b_ev": p["b_ev"],
        "w_ih_t": jnp.dot(p["w_fc"], w_cls_img, precision=hi).T,               # [9, 2048]
        "w_vh_t": w_cls_vis.T,                                                 # [9, 256]
        "b_head": jnp.dot(p["b_fc"], w_cls_img, precision=hi) + p["b_cls"],    # [1, 9]
    }


# ------------------------------ wrapper --------------------------------------
def multimodal_forward(x_img_nchw, x_vis_nchw, fp, *, compute_dtype=jnp.float32):
    B, C_img, H, W = x_img_nchw.shape
    _, C_vis, H2, W2 = x_vis_nchw.shape
    n_cls = fp["b_head"].shape[1]

    # NCHW -> [B, C, H*W]: no transpose; HW lands on the lane axis (dense vregs),
    # tiny channel counts (3 / 7) live on sublanes.
    x_img = x_img_nchw.reshape(B, C_img, H * W).astype(compute_dtype)
    x_vis = x_vis_nchw.reshape(B, C_vis, H2 * W2).astype(compute_dtype)

    # Matmul operands optionally cast (bf16 halves the dominant HBM traffic);
    # biases stay f32 (accumulation is always f32).
    w_ei = fp["w_ei"].astype(compute_dtype)
    w_ev = fp["w_ev"].astype(compute_dtype)
    w_ih_t = fp["w_ih_t"].astype(compute_dtype)
    w_vh_t = fp["w_vh_t"].astype(compute_dtype)

    # Tile selection (per perf review):
    #   * at least 2 grid steps so ("parallel",) shards across v7x's 2 TCs and
    #     input DMA overlaps compute across steps;
    #   * cap at 128 rows: keeps the [block_b, 2048] f32 feature intermediate at
    #     1 MiB and all padded activation buffers well inside v5e's 16 MiB
    #     default scoped VMEM;
    #   * pad B to a tile multiple (no single-giant-block fallback).
    def round_up(x, m):
        return ((x + m - 1) // m) * m

    block_b = min(128, round_up(pl.cdiv(B, 2), 8))
    B_pad = max(round_up(B, block_b), 2 * block_b)
    if B_pad > B:
        x_img = jnp.pad(x_img, ((0, B_pad - B), (0, 0), (0, 0)))
        x_vis = jnp.pad(x_vis, ((0, B_pad - B), (0, 0), (0, 0)))
    grid = (B_pad // block_b,)

    def batch_spec(shape):
        nd = len(shape)
        return pl.BlockSpec((block_b,) + tuple(shape[1:]),
                            lambda i, _nd=nd: (i,) + (0,) * (_nd - 1))

    def const_spec(shape):
        # Constant block index: single DMA, buffer reused across grid steps.
        nd = len(shape)
        return pl.BlockSpec(tuple(shape), lambda i, _nd=nd: (0,) * _nd)

    args = (x_img, x_vis,
            w_ei, fp["b_ei"],
            w_ev, fp["b_ev"],
            w_ih_t, w_vh_t, fp["b_head"])

    in_specs = [batch_spec(x_img.shape), batch_spec(x_vis.shape)] + \
               [const_spec(a.shape) for a in args[2:]]

    out = pl.pallas_call(
        multimodal_kernel,
        out_shape=jax.ShapeDtypeStruct((B_pad, n_cls), jnp.float32),
        grid=grid,
        in_specs=in_specs,
        # NOTE: lane width 9 -> masked store; negligible at this size.
        out_specs=pl.BlockSpec((block_b, n_cls), lambda i: (i, 0)),
        compiler_params=pltpu.CompilerParams(
            dimension_semantics=("parallel",)),
    )(*args)
    return out[:B]


# -------------------------- reference (plain JAX) ----------------------------
def multimodal_reference(x_img_nchw, x_vis_nchw, p):
    hi = jax.lax.Precision.HIGHEST
    B, C_img, H, W = x_img_nchw.shape
    _, C_vis, H2, W2 = x_vis_nchw.shape
    gi = jnp.mean(x_img_nchw.reshape(B, C_img, H * W), axis=-1)
    gv = jnp.mean(x_vis_nchw.reshape(B, C_vis, H2 * W2), axis=-1)
    feat_img = jnp.dot(gi, p["w_ei"], precision=hi) + p["b_ei"]
    # dropout(p=0.5) eval mode == identity
    f_img = jnp.dot(feat_img, p["w_fc"], precision=hi) + p["b_fc"]
    f_vis = jnp.dot(gv, p["w_ev"], precision=hi) + p["b_ev"]
    x_cat = jnp.concatenate([f_img, f_vis], axis=1)
    return jnp.dot(x_cat, p["w_cls"], precision=hi) + p["b_cls"]


# ------------------------------- main -----------------------------------------
if __name__ == "__main__":
    key = jax.random.PRNGKey(0)
    ks = jax.random.split(key, 12)

    B = 2
    C_IMG, H, W = 3, 16, 16          # RGB image input
    C_VIS, H2, W2 = 7, 8, 8          # visit-cube input (7 "day" channels)
    D_IMG_FEAT = 2048                # img_encoder output width
    D_VIS_FEAT = 256                 # DPN26 output width
    D_FC = 256                       # img_fc output width
    N_CLS = 9

    x_img = jax.random.normal(ks[0], (B, C_IMG, H, W), dtype=jnp.float32)
    x_vis = jax.random.normal(ks[1], (B, C_VIS, H2, W2), dtype=jnp.float32)

    params = {
        # stand-in encoders (see TODO at top)
        "w_ei":  jax.random.normal(ks[2], (C_IMG, D_IMG_FEAT), jnp.float32) * 0.05,
        "b_ei":  jax.random.normal(ks[3], (1, D_IMG_FEAT), jnp.float32) * 0.01,
        "w_ev":  jax.random.normal(ks[4], (C_VIS, D_VIS_FEAT), jnp.float32) * 0.05,
        "b_ev":  jax.random.normal(ks[5], (1, D_VIS_FEAT), jnp.float32) * 0.01,
        # img_fc: Linear(2048, 256)
        "w_fc":  jax.random.normal(ks[6], (D_IMG_FEAT, D_FC), jnp.float32) * 0.02,
        "b_fc":  jax.random.normal(ks[7], (1, D_FC), jnp.float32) * 0.01,
        # cls: Linear(512, 9)
        "w_cls": jax.random.normal(ks[8], (D_FC + D_VIS_FEAT, N_CLS), jnp.float32) * 0.02,
        "b_cls": jax.random.normal(ks[9], (1, N_CLS), jnp.float32) * 0.01,
    }

    # One-time offline fold (in serving this is done once at weight-load time,
    # shrinking the per-call weight DMA from ~2 MiB to ~90 KiB and laying the
    # head weights out lane-dense).
    folded = fold_head_params(params)

    out = multimodal_forward(x_img, x_vis, folded)
    out = jax.block_until_ready(out)

    ref = multimodal_reference(x_img, x_vis, params)
    assert out.shape == (B, N_CLS)
    assert jnp.allclose(out, ref, atol=1e-4, rtol=1e-4), "mismatch vs reference"

    print("KERNEL_OK")
</pallas_src>

<mosaic_0001>
module attributes {stable_mosaic.version = 11 : i64} {
  func.func @multimodal_kernel(%arg0: i32, %arg1: memref<8x3x256xf32, #tpu.memory_space<vmem>>, %arg2: memref<8x7x64xf32, #tpu.memory_space<vmem>>, %arg3: memref<3x2048xf32, #tpu.memory_space<vmem>>, %arg4: memref<1x2048xf32, #tpu.memory_space<vmem>>, %arg5: memref<7x256xf32, #tpu.memory_space<vmem>>, %arg6: memref<1x256xf32, #tpu.memory_space<vmem>>, %arg7: memref<9x2048xf32, #tpu.memory_space<vmem>>, %arg8: memref<9x256xf32, #tpu.memory_space<vmem>>, %arg9: memref<1x9xf32, #tpu.memory_space<vmem>>, %arg10: memref<8x9xf32, #tpu.memory_space<vmem>>) attributes {dimension_semantics = [#tpu.dimension_semantics<parallel>], iteration_bounds = array<i64: 2>, scalar_prefetch = 0 : i64, scratch_operands = 0 : i64, tpu.core_type = #tpu.core_type<tc>, window_params = [{transform_indices = @transform_0, window_bounds = array<i64: 8, 3, 256>}, {transform_indices = @transform_1, window_bounds = array<i64: 8, 7, 64>}, {pipeline_mode = #tpu.pipeline_mode<synchronous>, transform_indices = @transform_2, window_bounds = array<i64: 3, 2048>}, {pipeline_mode = #tpu.pipeline_mode<synchronous>, transform_indices = @transform_3, window_bounds = array<i64: 1, 2048>}, {pipeline_mode = #tpu.pipeline_mode<synchronous>, transform_indices = @transform_4, window_bounds = array<i64: 7, 256>}, {pipeline_mode = #tpu.pipeline_mode<synchronous>, transform_indices = @transform_5, window_bounds = array<i64: 1, 256>}, {pipeline_mode = #tpu.pipeline_mode<synchronous>, transform_indices = @transform_6, window_bounds = array<i64: 9, 2048>}, {pipeline_mode = #tpu.pipeline_mode<synchronous>, transform_indices = @transform_7, window_bounds = array<i64: 9, 256>}, {pipeline_mode = #tpu.pipeline_mode<synchronous>, transform_indices = @transform_8, window_bounds = array<i64: 1, 9>}, {transform_indices = @transform_9, window_bounds = array<i64: 8, 9>}]} {
    %c0 = arith.constant 0 : index
    %c0_0 = arith.constant 0 : index
    %c0_1 = arith.constant 0 : index
    %0 = vector.load %arg1[%c0, %c0_0, %c0_1] : memref<8x3x256xf32, #tpu.memory_space<vmem>>, vector<8x3x256xf32>
    %cst = arith.constant dense<0.000000e+00> : vector<8x3xf32>
    %1 = vector.multi_reduction <add>, %0, %cst [2] : vector<8x3x256xf32> to vector<8x3xf32>
    %cst_2 = arith.constant 2.560000e+02 : f32
    %2 = vector.broadcast %cst_2 : f32 to vector<8x3xf32>
    %3 = arith.divf %1, %2 : vector<8x3xf32>
    %c0_3 = arith.constant 0 : index
    %c0_4 = arith.constant 0 : index
    %4 = vector.load %arg3[%c0_3, %c0_4] : memref<3x2048xf32, #tpu.memory_space<vmem>>, vector<3x2048xf32>
    %cst_5 = arith.constant dense<0.000000e+00> : vector<8x2048xf32>
    %5 = tpu.matmul %3, %4, %cst_5 {dimension_numbers = #tpu.dot_dimension_numbers<[1], [0], [0], [1], [0, 0, 1, 1], [], []>} : vector<8x3xf32>, vector<3x2048xf32>, vector<8x2048xf32> -> vector<8x2048xf32>
    %c0_6 = arith.constant 0 : index
    %c0_7 = arith.constant 0 : index
    %6 = vector.load %arg4[%c0_6, %c0_7] : memref<1x2048xf32, #tpu.memory_space<vmem>>, vector<1x2048xf32>
    %7 = vector.broadcast %6 : vector<1x2048xf32> to vector<8x2048xf32>
    %8 = arith.addf %5, %7 : vector<8x2048xf32>
    %c0_8 = arith.constant 0 : index
    %c0_9 = arith.constant 0 : index
    %c0_10 = arith.constant 0 : index
    %9 = vector.load %arg2[%c0_8, %c0_9, %c0_10] : memref<8x7x64xf32, #tpu.memory_space<vmem>>, vector<8x7x64xf32>
    %cst_11 = arith.constant dense<0.000000e+00> : vector<8x7xf32>
    %10 = vector.multi_reduction <add>, %9, %cst_11 [2] : vector<8x7x64xf32> to vector<8x7xf32>
    %cst_12 = arith.constant 6.400000e+01 : f32
    %11 = vector.broadcast %cst_12 : f32 to vector<8x7xf32>
    %12 = arith.divf %10, %11 : vector<8x7xf32>
    %c0_13 = arith.constant 0 : index
    %c0_14 = arith.constant 0 : index
    %13 = vector.load %arg5[%c0_13, %c0_14] : memref<7x256xf32, #tpu.memory_space<vmem>>, vector<7x256xf32>
    %cst_15 = arith.constant dense<0.000000e+00> : vector<8x256xf32>
    %14 = tpu.matmul %12, %13, %cst_15 {dimension_numbers = #tpu.dot_dimension_numbers<[1], [0], [0], [1], [0, 0, 1, 1], [], []>} : vector<8x7xf32>, vector<7x256xf32>, vector<8x256xf32> -> vector<8x256xf32>
    %c0_16 = arith.constant 0 : index
    %c0_17 = arith.constant 0 : index
    %15 = vector.load %arg6[%c0_16, %c0_17] : memref<1x256xf32, #tpu.memory_space<vmem>>, vector<1x256xf32>
    %16 = vector.broadcast %15 : vector<1x256xf32> to vector<8x256xf32>
    %17 = arith.addf %14, %16 : vector<8x256xf32>
    %c0_18 = arith.constant 0 : index
    %c0_19 = arith.constant 0 : index
    %18 = vector.load %arg7[%c0_18, %c0_19] : memref<9x2048xf32, #tpu.memory_space<vmem>>, vector<9x2048xf32>
    %cst_20 = arith.constant dense<0.000000e+00> : vector<8x9xf32>
    %19 = tpu.matmul %8, %18, %cst_20 {dimension_numbers = #tpu.dot_dimension_numbers<[1], [1], [0], [0], [0, 0, 1, 0], [], []>} : vector<8x2048xf32>, vector<9x2048xf32>, vector<8x9xf32> -> vector<8x9xf32>
    %c0_21 = arith.constant 0 : index
    %c0_22 = arith.constant 0 : index
    %20 = vector.load %arg8[%c0_21, %c0_22] : memref<9x256xf32, #tpu.memory_space<vmem>>, vector<9x256xf32>
    %cst_23 = arith.constant dense<0.000000e+00> : vector<8x9xf32>
    %21 = tpu.matmul %17, %20, %cst_23 {dimension_numbers = #tpu.dot_dimension_numbers<[1], [1], [0], [0], [0, 0, 1, 0], [], []>} : vector<8x256xf32>, vector<9x256xf32>, vector<8x9xf32> -> vector<8x9xf32>
    %22 = arith.addf %19, %21 : vector<8x9xf32>
    %c0_24 = arith.constant 0 : index
    %c0_25 = arith.constant 0 : index
    %23 = vector.load %arg9[%c0_24, %c0_25] : memref<1x9xf32, #tpu.memory_space<vmem>>, vector<1x9xf32>
    %24 = vector.broadcast %23 : vector<1x9xf32> to vector<8x9xf32>
    %25 = arith.addf %22, %24 : vector<8x9xf32>
    %c0_26 = arith.constant 0 : index
    %c0_27 = arith.constant 0 : index
    %26 = vector.load %arg10[%c0_26, %c0_27] : memref<8x9xf32, #tpu.memory_space<vmem>>, vector<8x9xf32>
    tpu.vector_store %arg10[%c0_26, %c0_27], %25 {strides = array<i32>} : memref<8x9xf32, #tpu.memory_space<vmem>>, vector<8x9xf32>,
    return
  }
  func.func @transform_0(%arg0: i32) -> (i32, i32, i32) {
    %c0_i32 = arith.constant 0 : i32
    %c0_i32_0 = arith.constant 0 : i32
    %c0_i32_1 = arith.constant 0 : i32
    return %arg0, %c0_i32, %c0_i32_0 : i32, i32, i32
  }
  func.func @transform_1(%arg0: i32) -> (i32, i32, i32) {
    %c0_i32 = arith.constant 0 : i32
    %c0_i32_0 = arith.constant 0 : i32
    %c0_i32_1 = arith.constant 0 : i32
    return %arg0, %c0_i32, %c0_i32_0 : i32, i32, i32
  }
  func.func @transform_2(%arg0: i32) -> (i32, i32) {
    %c0_i32 = arith.constant 0 : i32
    %c0_i32_0 = arith.constant 0 : i32
    %c0_i32_1 = arith.constant 0 : i32
    return %c0_i32, %c0_i32_0 : i32, i32
  }
  func.func @transform_3(%arg0: i32) -> (i32, i32) {
    %c0_i32 = arith.constant 0 : i32
    %c0_i32_0 = arith.constant 0 : i32
    %c0_i32_1 = arith.constant 0 : i32
    return %c0_i32, %c0_i32_0 : i32, i32
  }
  func.func @transform_4(%arg0: i32) -> (i32, i32) {
    %c0_i32 = arith.constant 0 : i32
    %c0_i32_0 = arith.constant 0 : i32
    %c0_i32_1 = arith.constant 0 : i32
    return %c0_i32, %c0_i32_0 : i32, i32
  }
  func.func @transform_5(%arg0: i32) -> (i32, i32) {
    %c0_i32 = arith.constant 0 : i32
    %c0_i32_0 = arith.constant 0 : i32
    %c0_i32_1 = arith.constant 0 : i32
    return %c0_i32, %c0_i32_0 : i32, i32
  }
  func.func @transform_6(%arg0: i32) -> (i32, i32) {
    %c0_i32 = arith.constant 0 : i32
    %c0_i32_0 = arith.constant 0 : i32
    %c0_i32_1 = arith.constant 0 : i32
    return %c0_i32, %c0_i32_0 : i32, i32
  }
  func.func @transform_7(%arg0: i32) -> (i32, i32) {
    %c0_i32 = arith.constant 0 : i32
    %c0_i32_0 = arith.constant 0 : i32
    %c0_i32_1 = arith.constant 0 : i32
    return %c0_i32, %c0_i32_0 : i32, i32
  }
  func.func @transform_8(%arg0: i32) -> (i32, i32) {
    %c0_i32 = arith.constant 0 : i32
    %c0_i32_0 = arith.constant 0 : i32
    %c0_i32_1 = arith.constant 0 : i32
    return %c0_i32, %c0_i32_0 : i32, i32
  }
  func.func @transform_9(%arg0: i32) -> (i32, i32) {
    %c0_i32 = arith.constant 0 : i32
    %c0_i32_0 = arith.constant 0 : i32
    return %arg0, %c0_i32 : i32, i32
  }
}

</mosaic_0001>

<llo_original>
// kernel: tpu_custom_call.1
$region0: #{tpu_custom_call.1}
  #allocation0 [shape = 'u32[]', space=smem, size = 0x4, offset = 0x4, fixed_abs, tag = 'smem constant byte address 0x4 - core index']
  #allocation1 [shape = 'u32[72,128]{1,0:T(1,128)}', space=vmem, size = 0x9000, scoped, tag = 'internal scratch']
  %s0 = inlined_call_operand.vmem [shape: f32[16,3,256], index: 0, kind: input, shape index: {}]
  %s1 = inlined_call_operand.vmem [shape: f32[16,7,64], index: 1, kind: input, shape index: {}]
  %s2 = inlined_call_operand.vmem [shape: f32[3,2048], index: 2, kind: input, shape index: {}]
  %s3 = inlined_call_operand.hbm [shape: f32[1,2048], index: 3, kind: input, shape index: {}]
  %s4 = inlined_call_operand.hbm [shape: f32[7,256], index: 4, kind: input, shape index: {}]
  %s5 = inlined_call_operand.vmem [shape: f32[1,256], index: 5, kind: input, shape index: {}]
  %s6 = inlined_call_operand.vmem [shape: f32[9,2048], index: 6, kind: input, shape index: {}]
  %s7 = inlined_call_operand.vmem [shape: f32[9,256], index: 7, kind: input, shape index: {}]
  %s8 = inlined_call_operand.vmem [shape: f32[1,9], index: 8, kind: input, shape index: {}]
  %s9 = inlined_call_operand.hbm [shape: f32[16,9], index: 9, kind: output, shape index: {}]
  %s10 = sld [smem:[#allocation0]]
  $region77: #{tpu_custom_call.1} parent=0
    _
  %s12 = ssub.s32 1, %s10
  %s13 = scalar_select 0, %s12, %s10
  $region1: #{tpu_custom_call.1} parent=0
    #allocation2 [shape = 'u8[8192]{0}', space=vmem, size = 0x2000, scoped, tag = 'input window, operand 3, single buffered']
    #allocation3 [shape = 's32[2]{0}', space=sflag, size = 0x8, scoped, tag = 'scoped memory for tpu_custom_call.1']
    #allocation4 [shape = 's32[2]{0}', space=sflag, size = 0x8, scoped, tag = 'scoped memory for tpu_custom_call.1']
    #allocation5 [shape = 'u8[8192]{0}', space=vmem, size = 0x2000, scoped, tag = 'input window, operand 4, single buffered']
    #allocation6 [shape = 's32[1]{0}', space=sflag, size = 0x4, scoped, tag = 'scoped memory for tpu_custom_call.1']
    #allocation7 [shape = 'u8[8192]{0}', space=vmem, size = 0x2000, scoped, tag = 'output window, operand 0']
    %14 = vsyncpa [#allocation3], 0
    %15 = vsyncpa [#allocation6], 0
    %16 = vsyncpa [#allocation4], 0
    %s17 = scalar_lea.sflag [#allocation4], 1
    %18 = vsyncpa %s17, 0
    loop: start=0, step=1, limit=4
    $region2: #{tpu_custom_call.1} parent=1 // loop_pre_header
      _
    $region3: #{tpu_custom_call.1} parent=1 // loop_header
      %s20 = sphi 0, %s24
      %p21 = scmp.ge.s32.totalorder %s20, 4
      %s30 = sphi 0, %s32
      %s33 = sphi 0, %s30
      %s34 = sphi 0, %s33
      %s50 = sphi 0, %s34
      %s56 = sphi 0, %s58
      %s59 = sphi 0, %s56
      %s60 = sphi 0, %s59
      %s76 = sphi 0, %s60
      %s80 = sphi 0, %s80
      %s82 = sphi 0, %s80
      %s83 = sphi 0, %s82
      %s97 = sphi 0, %s83
      %s101 = sphi 0, %s101
      %s103 = sphi 0, %s101
      %s104 = sphi 0, %s103
      %s118 = sphi 0, %s104
      %s122 = sphi 0, %s122
      %s124 = sphi 0, %s122
      %s125 = sphi 0, %s124
      %s139 = sphi 0, %s125
      %s143 = sphi 0, %s143
      %s145 = sphi 0, %s143
      %s146 = sphi 0, %s145
      %s160 = sphi 0, %s146
      %s164 = sphi 0, %s164
      %s166 = sphi 0, %s164
      %s167 = sphi 0, %s166
      %s181 = sphi 0, %s167
      %s185 = sphi 0, %s185
      %s187 = sphi 0, %s185
      %s188 = sphi 0, %s187
      %s202 = sphi 0, %s188
      %s206 = sphi 0, %s206
      %s208 = sphi 0, %s206
      %s209 = sphi 0, %s208
      %s223 = sphi 0, %s209
      %s229 = sphi 0, %s231
      %s232 = sphi 0, %s229
      %s233 = sphi 0, %s232
      %s249 = sphi 0, %s233
    $region4: #{tpu_custom_call.1} parent=1 // loop_header_branch
      %23 = sbr.rel (%p21) target = $region8
    $region5: #{tpu_custom_call.1} parent=1 // loop_body
      %s25 = ssub.s32 %s20, 1
      %s26 = ssub.s32 %s20, 2
      %s27 = sadd.s32 %s20, 1
      %s28 = ssub.s32 %s20, %s27
      %p29 = scmp.eq.s32.totalorder %s28, 0
      %s31 = sadd.s32 %s30, 1
      %s32 = scalar_select %p29, %s30, %s31
      %p35 = pneg %p29
      %p36 = scmp.eq.s32.totalorder %s20, 1
      %p37 = por %p35, %p36
      %p38 = scmp.ne.s32.totalorder %s30, %s33
      %p39 = scmp.eq.s32.totalorder %s20, 0
      %p40 = por %p38, %p39
      %p41 = scmp.ne.s32.totalorder %s30, %s33
      %p42 = scmp.eq.s32.totalorder %s25, 1
      %p43 = por %p41, %p42
      %p44 = scmp.ne.s32.totalorder %s33, %s34
      %p45 = scmp.eq.s32.totalorder %s25, 0
      %p46 = por %p44, %p45
      %p47 = scmp.ne.s32.totalorder %s33, %s34
      %p48 = scmp.eq.s32.totalorder %s26, 1
      %p49 = por %p47, %p48
      %p51 = scmp.ne.s32.totalorder %s34, %s50
      %p52 = scmp.eq.s32.totalorder %s26, 0
      %p53 = por %p51, %p52
      %s54 = ssub.s32 %s20, %s27
      %p55 = scmp.eq.s32.totalorder %s54, 0
      %s57 = sadd.s32 %s56, 1
      %s58 = scalar_select %p55, %s56, %s57
      %p61 = pneg %p55
      %p62 = scmp.eq.s32.totalorder %s20, 1
      %p63 = por %p61, %p62
      %p64 = scmp.ne.s32.totalorder %s56, %s59
      %p65 = scmp.eq.s32.totalorder %s20, 0
      %p66 = por %p64, %p65
      %p67 = scmp.ne.s32.totalorder %s56, %s59
      %p68 = scmp.eq.s32.totalorder %s25, 1
      %p69 = por %p67, %p68
      %p70 = scmp.ne.s32.totalorder %s59, %s60
      %p71 = scmp.eq.s32.totalorder %s25, 0
      %p72 = por %p70, %p71
      %p73 = scmp.ne.s32.totalorder %s59, %s60
      %p74 = scmp.eq.s32.totalorder %s26, 1
      %p75 = por %p73, %p74
      %p77 = scmp.ne.s32.totalorder %s60, %s76
      %p78 = scmp.eq.s32.totalorder %s26, 0
      %p79 = por %p77, %p78
      %s81 = sadd.s32 %s80, 1
      %p84 = scmp.eq.s32.totalorder %s20, 1
      %p85 = scmp.ne.s32.totalorder %s80, %s82
      %p86 = scmp.eq.s32.totalorder %s20, 0
      %p87 = por %p85, %p86
      %p88 = scmp.ne.s32.totalorder %s80, %s82
      %p89 = scmp.eq.s32.totalorder %s25, 1
      %p90 = por %p88, %p89
      %p91 = scmp.ne.s32.totalorder %s82, %s83
      %p92 = scmp.eq.s32.totalorder %s25, 0
      %p93 = por %p91, %p92
      %p94 = scmp.ne.s32.totalorder %s82, %s83
      %p95 = scmp.eq.s32.totalorder %s26, 1
      %p96 = por %p94, %p95
      %p98 = scmp.ne.s32.totalorder %s83, %s97
      %p99 = scmp.eq.s32.totalorder %s26, 0
      %p100 = por %p98, %p99
      %s102 = sadd.s32 %s101, 1
      %p105 = scmp.eq.s32.totalorder %s20, 1
      %p106 = scmp.ne.s32.totalorder %s101, %s103
      %p107 = scmp.eq.s32.totalorder %s20, 0
      %p108 = por %p106, %p107
      %p109 = scmp.ne.s32.totalorder %s101, %s103
      %p110 = scmp.eq.s32.totalorder %s25, 1
      %p111 = por %p109, %p110
      %p112 = scmp.ne.s32.totalorder %s103, %s104
      %p113 = scmp.eq.s32.totalorder %s25, 0
      %p114 = por %p112, %p113
      %p115 = scmp.ne.s32.totalorder %s103, %s104
      %p116 = scmp.eq.s32.totalorder %s26, 1
      %p117 = por %p115, %p116
      %p119 = scmp.ne.s32.totalorder %s104, %s118
      %p120 = scmp.eq.s32.totalorder %s26, 0
      %p121 = por %p119, %p120
      %s123 = sadd.s32 %s122, 1
      %p126 = scmp.eq.s32.totalorder %s20, 1
      %p127 = scmp.ne.s32.totalorder %s122, %s124
      %p128 = scmp.eq.s32.totalorder %s20, 0
      %p129 = por %p127, %p128
      %p130 = scmp.ne.s32.totalorder %s122, %s124
      %p131 = scmp.eq.s32.totalorder %s25, 1
      %p132 = por %p130, %p131
      %p133 = scmp.ne.s32.totalorder %s124, %s125
      %p134 = scmp.eq.s32.totalorder %s25, 0
      %p135 = por %p133, %p134
      %p136 = scmp.ne.s32.totalorder %s124, %s125
      %p137 = scmp.eq.s32.totalorder %s26, 1
      %p138 = por %p136, %p137
      %p140 = scmp.ne.s32.totalorder %s125, %s139
      %p141 = scmp.eq.s32.totalorder %s26, 0
      %p142 = por %p140, %p141
      %s144 = sadd.s32 %s143, 1
      %p147 = scmp.eq.s32.totalorder %s20, 1
      %p148 = scmp.ne.s32.totalorder %s143, %s145
      %p149 = scmp.eq.s32.totalorder %s20, 0
      %p150 = por %p148, %p149
      %p151 = scmp.ne.s32.totalorder %s143, %s145
      %p152 = scmp.eq.s32.totalorder %s25, 1
      %p153 = por %p151, %p152
      %p154 = scmp.ne.s32.totalorder %s145, %s146
      %p155 = scmp.eq.s32.totalorder %s25, 0
      %p156 = por %p154, %p155
      %p157 = scmp.ne.s32.totalorder %s145, %s146
      %p158 = scmp.eq.s32.totalorder %s26, 1
      %p159 = por %p157, %p158
      %p161 = scmp.ne.s32.totalorder %s146, %s160
      %p162 = scmp.eq.s32.totalorder %s26, 0
      %p163 = por %p161, %p162
      %s165 = sadd.s32 %s164, 1
      %p168 = scmp.eq.s32.totalorder %s20, 1
      %p169 = scmp.ne.s32.totalorder %s164, %s166
      %p170 = scmp.eq.s32.totalorder %s20, 0
      %p171 = por %p169, %p170
      %p172 = scmp.ne.s32.totalorder %s164, %s166
      %p173 = scmp.eq.s32.totalorder %s25, 1
      %p174 = por %p172, %p173
      %p175 = scmp.ne.s32.totalorder %s166, %s167
      %p176 = scmp.eq.s32.totalorder %s25, 0
      %p177 = por %p175, %p176
      %p178 = scmp.ne.s32.totalorder %s166, %s167
      %p179 = scmp.eq.s32.totalorder %s26, 1
      %p180 = por %p178, %p179
      %p182 = scmp.ne.s32.totalorder %s167, %s181
      %p183 = scmp.eq.s32.totalorder %s26, 0
      %p184 = por %p182, %p183
      %s186 = sadd.s32 %s185, 1
      %p189 = scmp.eq.s32.totalorder %s20, 1
      %p190 = scmp.ne.s32.totalorder %s185, %s187
      %p191 = scmp.eq.s32.totalorder %s20, 0
      %p192 = por %p190, %p191
      %p193 = scmp.ne.s32.totalorder %s185, %s187
      %p194 = scmp.eq.s32.totalorder %s25, 1
      %p195 = por %p193, %p194
      %p196 = scmp.ne.s32.totalorder %s187, %s188
      %p197 = scmp.eq.s32.totalorder %s25, 0
      %p198 = por %p196, %p197
      %p199 = scmp.ne.s32.totalorder %s187, %s188
      %p200 = scmp.eq.s32.totalorder %s26, 1
      %p201 = por %p199, %p200
      %p203 = scmp.ne.s32.totalorder %s188, %s202
      %p204 = scmp.eq.s32.totalorder %s26, 0
      %p205 = por %p203, %p204
      %s207 = sadd.s32 %s206, 1
      %p210 = scmp.eq.s32.totalorder %s20, 1
      %p211 = scmp.ne.s32.totalorder %s206, %s208
      %p212 = scmp.eq.s32.totalorder %s20, 0
      %p213 = por %p211, %p212
      %p214 = scmp.ne.s32.totalorder %s206, %s208
      %p215 = scmp.eq.s32.totalorder %s25, 1
      %p216 = por %p214, %p215
      %p217 = scmp.ne.s32.totalorder %s208, %s209
      %p218 = scmp.eq.s32.totalorder %s25, 0
      %p219 = por %p217, %p218
      %p220 = scmp.ne.s32.totalorder %s208, %s209
      %p221 = scmp.eq.s32.totalorder %s26, 1
      %p222 = por %p220, %p221
      %p224 = scmp.ne.s32.totalorder %s209, %s223
      %p225 = scmp.eq.s32.totalorder %s26, 0
      %p226 = por %p224, %p225
      %s227 = ssub.s32 %s20, %s27
      %p228 = scmp.eq.s32.totalorder %s227, 0
      %s230 = sadd.s32 %s229, 1
      %s231 = scalar_select %p228, %s229, %s230
      %p234 = pneg %p228
      %p235 = scmp.eq.s32.totalorder %s20, 1
      %p236 = por %p234, %p235
      %p237 = scmp.ne.s32.totalorder %s229, %s232
      %p238 = scmp.eq.s32.totalorder %s20, 0
      %p239 = por %p237, %p238
      %p240 = scmp.ne.s32.totalorder %s229, %s232
      %p241 = scmp.eq.s32.totalorder %s25, 1
      %p242 = por %p240, %p241
      %p243 = scmp.ne.s32.totalorder %s232, %s233
      %p244 = scmp.eq.s32.totalorder %s25, 0
      %p245 = por %p243, %p244
      %p246 = scmp.ne.s32.totalorder %s232, %s233
      %p247 = scmp.eq.s32.totalorder %s26, 1
      %p248 = por %p246, %p247
      %p250 = scmp.ne.s32.totalorder %s233, %s249
      %p251 = scmp.eq.s32.totalorder %s26, 0
      %p252 = por %p250, %p251
      %p253 = scmp.le.s32.totalorder 1, %s20
      %p254 = scmp.lt.s32.totalorder %s20, 3
      %p255 = pnand %p253, %p254
      %p256 = pneg %p255
      // Predicated region
      $region9: #{tpu_custom_call.1} parent=5 // pred_check
        _
      $region10: #{tpu_custom_call.1} parent=5 // pred_check_branch
        %258 = sbr.rel (%p255) target = $region12
      $region11: #{tpu_custom_call.1} parent=5 // pred_region
        %s259 = ssub.s32 %s20, 1
        // Predicated region
        $region13: #{tpu_custom_call.1} parent=11 // pred_check
          %p260 = pneg %p93
        $region14: #{tpu_custom_call.1} parent=11 // pred_check_branch
          %262 = sbr.rel (%p260) target = $region16
        $region15: #{tpu_custom_call.1} parent=11 // pred_region
          _
        $region16: #{tpu_custom_call.1} parent=11 // pred_fallthru
          _
        // Predicated region
        $region17: #{tpu_custom_call.1} parent=11 // pred_check
          %p263 = pneg %p114
        $region18: #{tpu_custom_call.1} parent=11 // pred_check_branch
          %265 = sbr.rel (%p263) target = $region20
        $region19: #{tpu_custom_call.1} parent=11 // pred_region
          %267 = vsyncadd [#allocation3], 0
          %s269 = sshll.u32 %s3, 4
          %s270 = int_to_ptr.hbm [resolvable:$true] %s269
          %s271 = sshll.u32 [#allocation2], 4
          %s272 = int_to_ptr.vmem [resolvable:$true] %s271
          %274 = dma.hbm_to_vmem [thread:$0]  %s270, 256, %s272, [#allocation3]
        $region20: #{tpu_custom_call.1} parent=11 // pred_fallthru
          _
        // Predicated region
        $region21: #{tpu_custom_call.1} parent=11 // pred_check
          %p275 = pneg %p135
        $region22: #{tpu_custom_call.1} parent=11 // pred_check_branch
          %277 = sbr.rel (%p275) target = $region24
        $region23: #{tpu_custom_call.1} parent=11 // pred_region
          %279 = vsyncadd [#allocation6], 0
          %s281 = sshll.u32 %s4, 4
          %s282 = int_to_ptr.hbm [resolvable:$true] %s281
          %s283 = sshll.u32 [#allocation5], 4
          %s284 = int_to_ptr.vmem [resolvable:$true] %s283
          %286 = dma.hbm_to_vmem [thread:$0]  %s282, 256, %s284, [#allocation6]
        $region24: #{tpu_custom_call.1} parent=11 // pred_fallthru
          _
        // Predicated region
        $region25: #{tpu_custom_call.1} parent=11 // pred_check
          %p287 = pneg %p156
        $region26: #{tpu_custom_call.1} parent=11 // pred_check_branch
          %289 = sbr.rel (%p287) target = $region28
        $region27: #{tpu_custom_call.1} parent=11 // pred_region
          _
        $region28: #{tpu_custom_call.1} parent=11 // pred_fallthru
          _
        // Predicated region
        $region29: #{tpu_custom_call.1} parent=11 // pred_check
          %p290 = pneg %p177
        $region30: #{tpu_custom_call.1} parent=11 // pred_check_branch
          %292 = sbr.rel (%p290) target = $region32
        $region31: #{tpu_custom_call.1} parent=11 // pred_region
          _
        $region32: #{tpu_custom_call.1} parent=11 // pred_fallthru
          _
        // Predicated region
        $region33: #{tpu_custom_call.1} parent=11 // pred_check
          %p293 = pneg %p198
        $region34: #{tpu_custom_call.1} parent=11 // pred_check_branch
          %295 = sbr.rel (%p293) target = $region36
        $region35: #{tpu_custom_call.1} parent=11 // pred_region
          _
        $region36: #{tpu_custom_call.1} parent=11 // pred_fallthru
          _
        // Predicated region
        $region37: #{tpu_custom_call.1} parent=11 // pred_check
          %p296 = pneg %p219
        $region38: #{tpu_custom_call.1} parent=11 // pred_check_branch
          %298 = sbr.rel (%p296) target = $region40
        $region39: #{tpu_custom_call.1} parent=11 // pred_region
          _
        $region40: #{tpu_custom_call.1} parent=11 // pred_fallthru
          _
      $region12: #{tpu_custom_call.1} parent=5 // pred_fallthru
        _
      %p299 = scmp.lt.s32.totalorder %s20, 2
      // Predicated region
      $region41: #{tpu_custom_call.1} parent=5 // pred_check
        %p300 = pneg %p299
      $region42: #{tpu_custom_call.1} parent=5 // pred_check_branch
        %302 = sbr.rel (%p300) target = $region44
      $region43: #{tpu_custom_call.1} parent=5 // pred_region
        // Predicated region
        $region45: #{tpu_custom_call.1} parent=43 // pred_check
          %p303 = pneg %p40
        $region46: #{tpu_custom_call.1} parent=43 // pred_check_branch
          %305 = sbr.rel (%p303) target = $region48
        $region47: #{tpu_custom_call.1} parent=43 // pred_region
          %s306 = smul.u32 8, %s20
          %p307 = scmp.lt.s32.totalorder %s306, 15
          %s308 = scalar_select %p307, %s306, 15
          %s309 = smul.addr %s308, 2
          %s310 = smul.addr %s309, 4
          %s311 = scalar_lea.vmem %s0, %s310
          %s312 = smul.u32 8, %s20
        $region48: #{tpu_custom_call.1} parent=43 // pred_fallthru
          _
        // Predicated region
        $region49: #{tpu_custom_call.1} parent=43 // pred_check
          %p313 = pneg %p66
        $region50: #{tpu_custom_call.1} parent=43 // pred_check_branch
          %315 = sbr.rel (%p313) target = $region52
        $region51: #{tpu_custom_call.1} parent=43 // pred_region
          %s316 = smul.u32 8, %s20
          %p317 = scmp.lt.s32.totalorder %s316, 15
          %s318 = scalar_select %p317, %s316, 15
          %s319 = smul.addr %s318, 8
          %s320 = scalar_lea.vmem %s1, %s319
          %s321 = smul.u32 8, %s20
        $region52: #{tpu_custom_call.1} parent=43 // pred_fallthru
          _
      $region44: #{tpu_custom_call.1} parent=5 // pred_fallthru
        _
      %p322 = scmp.le.s32.totalorder 1, %s20
      %p323 = scmp.lt.s32.totalorder %s20, 3
      %p324 = pnand %p322, %p323
      %p325 = pneg %p324
      // Predicated region
      $region53: #{tpu_custom_call.1} parent=5 // pred_check
        _
      $region54: #{tpu_custom_call.1} parent=5 // pred_check_branch
        %327 = sbr.rel (%p324) target = $region56
      $region55: #{tpu_custom_call.1} parent=5 // pred_region
        %s328 = ssub.s32 %s20, 1
        // Predicated region
        $region57: #{tpu_custom_call.1} parent=55 // pred_check
          %p329 = pneg %p114
        $region58: #{tpu_custom_call.1} parent=55 // pred_check_branch
          %331 = sbr.rel (%p329) target = $region60
        $region59: #{tpu_custom_call.1} parent=55 // pred_region
          %333 = dma.done [#allocation3], 256
        $region60: #{tpu_custom_call.1} parent=55 // pred_fallthru
          _
        // Predicated region
        $region61: #{tpu_custom_call.1} parent=55 // pred_check
          %p334 = pneg %p135
        $region62: #{tpu_custom_call.1} parent=55 // pred_check_branch
          %336 = sbr.rel (%p334) target = $region64
        $region63: #{tpu_custom_call.1} parent=55 // pred_region
          %338 = dma.done [#allocation6], 256
        $region64: #{tpu_custom_call.1} parent=55 // pred_fallthru
          _
        %s339 = smul.u32 8, %s25
        %p340 = scmp.lt.s32.totalorder %s339, 15
        %s341 = scalar_select %p340, %s339, 15
        %s342 = smul.addr %s341, 2
        %s343 = smul.addr %s342, 4
        %s344 = scalar_lea.vmem %s0, %s343
        %p345 = pneg %p46
        %p346 = pneg %p43
        %s347 = smul.u32 8, %s25
        %p348 = scmp.lt.s32.totalorder %s347, 15
        %s349 = scalar_select %p348, %s347, 15
        %s350 = smul.addr %s349, 8
        %s351 = scalar_lea.vmem %s1, %s350
        %p352 = pneg %p72
        %p353 = pneg %p69
        %p354 = pneg %p93
        %p355 = pneg %p90
        %p356 = pneg %p114
        %p357 = pneg %p111
        %p358 = pneg %p135
        %p359 = pneg %p132
        %p360 = pneg %p156
        %p361 = pneg %p153
        %p362 = pneg %p177
        %p363 = pneg %p174
        %p364 = pneg %p198
        %p365 = pneg %p195
        %p366 = pneg %p219
        %p367 = pneg %p216
        %p368 = pneg %p245
        %p369 = pneg %p242
        %s370 = sand.u32 %s232, 1
        %s371 = scalar_lea.sflag [#allocation4], %s370
        %s372 = sand.u32 %s232, 1
        %s373 = smul.addr %s372, 8
        %s374 = scalar_lea.vmem [#allocation7], %s373
        %s375 = smul.u32 8, %s25
        %p376 = scmp.lt.s32.totalorder %s375, 15
        %s377 = scalar_select %p376, %s375, 15
        %s378 = smul.addr %s377, 2
        %s379 = smul.addr %s378, 4
        %s380 = scalar_lea.vmem %s0, %s379
        %s381 = smul.u32 8, %s25
        %s382 = smul.u32 8, %s25
        %p383 = scmp.lt.s32.totalorder %s382, 15
        %s384 = scalar_select %p383, %s382, 15
        %s385 = smul.addr %s384, 8
        %s386 = scalar_lea.vmem %s1, %s385
        %s387 = smul.u32 8, %s25
        %v388 = vld [vmem:[%s380] sm:$0x77]
        %v389 = vld [vmem:[%s380 + $0x8] sm:$0x77]
        %v390 = vld [vmem:[%s380 + $0x10] sm:$0x77]
        %v391 = vld [vmem:[%s380 + $0x18] sm:$0x77]
        %v392 = vld [vmem:[%s380 + $0x20] sm:$0x77]
        %v393 = vld [vmem:[%s380 + $0x28] sm:$0x77]
        %v394 = vld [vmem:[%s380 + $0x30] sm:$0x77]
        %v395 = vld [vmem:[%s380 + $0x38] sm:$0x77]
        %404 = vst [vmem:[#allocation1] ss:$2 sm:$0xff] %v388
        %v405 = vld.sshfl [vmem:[#allocation1] sm:$0xff pattern:$0x75316420]
        %v406 = vld.sshfl [vmem:[#allocation1 + $0x8] sm:$0xff pattern:$0x75316420]
        %s407 = scalar_lea.vmem [#allocation1], 16
        %408 = vst [vmem:[%s407] ss:$2 sm:$0xff] %v389
        %v409 = vld.sshfl [vmem:[#allocation1 + $0x10] sm:$0xff pattern:$0x75316420]
        %v410 = vld.sshfl [vmem:[#allocation1 + $0x18] sm:$0xff pattern:$0x75316420]
        %s411 = scalar_lea.vmem [#allocation1], 32
        %412 = vst [vmem:[%s411] ss:$2 sm:$0xff] %v390
        %v413 = vld.sshfl [vmem:[#allocation1 + $0x20] sm:$0xff pattern:$0x75316420]
        %v414 = vld.sshfl [vmem:[#allocation1 + $0x28] sm:$0xff pattern:$0x75316420]
        %s415 = scalar_lea.vmem [#allocation1], 48
        %416 = vst [vmem:[%s415] ss:$2 sm:$0xff] %v391
        %v417 = vld.sshfl [vmem:[#allocation1 + $0x30] sm:$0xff pattern:$0x75316420]
        %v418 = vld.sshfl [vmem:[#allocation1 + $0x38] sm:$0xff pattern:$0x75316420]
        %419 = vst [vmem:[#allocation1] ss:$2 sm:$0xff] %v392
        %v420 = vld.sshfl [vmem:[#allocation1] sm:$0xff pattern:$0x75316420]
        %v421 = vld.sshfl [vmem:[#allocation1 + $0x8] sm:$0xff pattern:$0x75316420]
        %422 = vst [vmem:[%s407] ss:$2 sm:$0xff] %v393
        %v423 = vld.sshfl [vmem:[#allocation1 + $0x10] sm:$0xff pattern:$0x75316420]
        %v424 = vld.sshfl [vmem:[#allocation1 + $0x18] sm:$0xff pattern:$0x75316420]
        %425 = vst [vmem:[%s411] ss:$2 sm:$0xff] %v394
        %v426 = vld.sshfl [vmem:[#allocation1 + $0x20] sm:$0xff pattern:$0x75316420]
        %v427 = vld.sshfl [vmem:[#allocation1 + $0x28] sm:$0xff pattern:$0x75316420]
        %428 = vst [vmem:[%s415] ss:$2 sm:$0xff] %v395
        %v429 = vld.sshfl [vmem:[#allocation1 + $0x30] sm:$0xff pattern:$0x75316420]
        %v430 = vld.sshfl [vmem:[#allocation1 + $0x38] sm:$0xff pattern:$0x75316420]
        %vm447 = vcmask 1042432
        %v448 = vsel %vm447, %v405, 0.0
        %v449 = vsel %vm447, %v406, 0.0
        %v450 = vadd.f32 %v448, %v449
        %451 = vadd.xlane.f32.xlu0 %v450
        %v452 = vpop.xlane.xlu0 %451
        %v453 = vsel %vm447, %v409, 0.0
        %v454 = vsel %vm447, %v410, 0.0
        %v455 = vadd.f32 %v453, %v454
        %456 = vadd.xlane.f32.xlu0 %v455
        %v457 = vpop.xlane.xlu0 %456
        %v458 = vsel %vm447, %v413, 0.0
        %v459 = vsel %vm447, %v414, 0.0
        %v460 = vadd.f32 %v458, %v459
        %461 = vadd.xlane.f32.xlu0 %v460
        %v462 = vpop.xlane.xlu0 %461
        %v463 = vsel %vm447, %v417, 0.0
        %v464 = vsel %vm447, %v418, 0.0
        %v465 = vadd.f32 %v463, %v464
        %466 = vadd.xlane.f32.xlu0 %v465
        %v467 = vpop.xlane.xlu0 %466
        %v468 = vsel %vm447, %v420, 0.0
        %v469 = vsel %vm447, %v421, 0.0
        %v470 = vadd.f32 %v468, %v469
        %471 = vadd.xlane.f32.xlu0 %v470
        %v472 = vpop.xlane.xlu0 %471
        %v473 = vsel %vm447, %v423, 0.0
        %v474 = vsel %vm447, %v424, 0.0
        %v475 = vadd.f32 %v473, %v474
        %476 = vadd.xlane.f32.xlu0 %v475
        %v477 = vpop.xlane.xlu0 %476
        %v478 = vsel %vm447, %v426, 0.0
        %v479 = vsel %vm447, %v427, 0.0
        %v480 = vadd.f32 %v478, %v479
        %481 = vadd.xlane.f32.xlu0 %v480
        %v482 = vpop.xlane.xlu0 %481
        %v483 = vsel %vm447, %v429, 0.0
        %v484 = vsel %vm447, %v430, 0.0
        %v485 = vadd.f32 %v483, %v484
        %486 = vadd.xlane.f32.xlu0 %v485
        %v487 = vpop.xlane.xlu0 %486
        %v488 = vrcp.pop 256.0
        %v489 = vmul.f32 256.0, %v488
        %v490 = vsub.f32 1.0, %v489
        %v491 = vmul.f32 %v488, %v490
        %v492 = vadd.f32 %v488, %v491
        %vm493 = vweird.f32 %v488
        %v494 = vsel %vm493, %v488, %v492
        %v495 = vmul.f32 %v452, %v494
        %v496 = vmul.f32 %v457, %v494
        %v497 = vmul.f32 %v462, %v494
        %v498 = vmul.f32 %v467, %v494
        %v499 = vmul.f32 %v472, %v494
        %v500 = vmul.f32 %v477, %v494
        %v501 = vmul.f32 %v482, %v494
        %v502 = vmul.f32 %v487, %v494
        %v503 = vld [vmem:[%s2] sm:$0x77]
        %v504 = vld [vmem:[%s2 + $0x8] sm:$0x77]
        %v505 = vld [vmem:[%s2 + $0x10] sm:$0x77]
        %v506 = vld [vmem:[%s2 + $0x18] sm:$0x77]
        %v507 = vld [vmem:[%s2 + $0x20] sm:$0x77]
        %v508 = vld [vmem:[%s2 + $0x28] sm:$0x77]
        %v509 = vld [vmem:[%s2 + $0x30] sm:$0x77]
        %v510 = vld [vmem:[%s2 + $0x38] sm:$0x77]
        %v511 = vld [vmem:[#allocation2] sm:$0xff]
        %v512 = vld [vmem:[#allocation2 + $0x8] sm:$0xff]
        %v515 = vperm.slane %v511, 0
        %v516 = vperm.slane %v511, 1
        %v517 = vperm.slane %v511, 2
        %v518 = vperm.slane %v511, 3
        %v519 = vperm.slane %v511, 4
        %v520 = vperm.slane %v511, 5
        %v521 = vperm.slane %v511, 6
        %v522 = vperm.slane %v511, 7
        %v523 = vperm.slane %v512, 0
        %v524 = vperm.slane %v512, 1
        %v525 = vperm.slane %v512, 2
        %v526 = vperm.slane %v512, 3
        %v527 = vperm.slane %v512, 4
        %v528 = vperm.slane %v512, 5
        %v529 = vperm.slane %v512, 6
        %v530 = vperm.slane %v512, 7
        %v555 = vlaneseq
        %v556 = vand.u32 %v555, 127
        %v557 = vperm.slane %v495, %v556
        %v558 = vperm.slane %v496, %v556
        %v559 = vperm.slane %v497, %v556
        %v560 = vperm.slane %v498, %v556
        %v561 = vperm.slane %v499, %v556
        %v562 = vperm.slane %v500, %v556
        %v563 = vperm.slane %v501, %v556
        %v564 = vperm.slane %v502, %v556
        %vm565 = vcmask 1041409
        %v566 = vsel %vm565, %v558, %v557
        %vm567 = vcmask 1042434
        %v568 = vsel %vm567, %v559, %v566
        %vm569 = vcmask 1043459
        %v570 = vsel %vm569, %v560, %v568
        %vm571 = vcmask 1044484
        %v572 = vsel %vm571, %v561, %v570
        %vm573 = vcmask 1045509
        %v574 = vsel %vm573, %v562, %v572
        %vm575 = vcmask 1046534
        %v576 = vsel %vm575, %v563, %v574
        %vm577 = vcmask 1047559
        %v578 = vsel %vm577, %v564, %v576
        %587 = vst [vmem:[#allocation1] ss:$2 sm:$0xff] %v503
        %s588 = scalar_lea.vmem [#allocation1], 16
        %589 = vst [vmem:[%s588] ss:$2 sm:$0xff] %v504
        %s590 = scalar_lea.vmem [#allocation1], 32
        %591 = vst [vmem:[%s590] ss:$2 sm:$0xff] %v505
        %s592 = scalar_lea.vmem [#allocation1], 48
        %593 = vst [vmem:[%s592] ss:$2 sm:$0xff] %v506
        %v594 = vld.sshfl [vmem:[#allocation1] sm:$0xff pattern:$0x75316420]
        %v595 = vld.sshfl [vmem:[#allocation1 + $0x8] sm:$0xff pattern:$0x75316420]
        %v596 = vld.sshfl [vmem:[#allocation1 + $0x10] sm:$0xff pattern:$0x75316420]
        %v597 = vld.sshfl [vmem:[#allocation1 + $0x18] sm:$0xff pattern:$0x75316420]
        %v598 = vld.sshfl [vmem:[#allocation1 + $0x20] sm:$0xff pattern:$0x75316420]
        %v599 = vld.sshfl [vmem:[#allocation1 + $0x28] sm:$0xff pattern:$0x75316420]
        %v600 = vld.sshfl [vmem:[#allocation1 + $0x30] sm:$0xff pattern:$0x75316420]
        %v601 = vld.sshfl [vmem:[#allocation1 + $0x38] sm:$0xff pattern:$0x75316420]
        %602 = vst [vmem:[#allocation1] ss:$2 sm:$0xff] %v507
        %603 = vst [vmem:[%s588] ss:$2 sm:$0xff] %v508
        %604 = vst [vmem:[%s590] ss:$2 sm:$0xff] %v509
        %605 = vst [vmem:[%s592] ss:$2 sm:$0xff] %v510
        %v606 = vld.sshfl [vmem:[#allocation1] sm:$0xff pattern:$0x75316420]
        %v607 = vld.sshfl [vmem:[#allocation1 + $0x8] sm:$0xff pattern:$0x75316420]
        %v608 = vld.sshfl [vmem:[#allocation1 + $0x10] sm:$0xff pattern:$0x75316420]
        %v609 = vld.sshfl [vmem:[#allocation1 + $0x18] sm:$0xff pattern:$0x75316420]
        %v610 = vld.sshfl [vmem:[#allocation1 + $0x20] sm:$0xff pattern:$0x75316420]
        %v611 = vld.sshfl [vmem:[#allocation1 + $0x28] sm:$0xff pattern:$0x75316420]
        %v612 = vld.sshfl [vmem:[#allocation1 + $0x30] sm:$0xff pattern:$0x75316420]
        %v613 = vld.sshfl [vmem:[#allocation1 + $0x38] sm:$0xff pattern:$0x75316420]
        %vm614 = vcmask 23552
        %v615 = vsel %vm614, %v578, 0
        %v617 = vsel %vm447, %v594, 0
        %v619 = vsel %vm447, %v595, 0
        %v621 = vsel %vm447, %v596, 0
        %v623 = vsel %vm447, %v597, 0
        %v625 = vsel %vm447, %v598, 0
        %v627 = vsel %vm447, %v599, 0
        %v629 = vsel %vm447, %v600, 0
        %v631 = vsel %vm447, %v601, 0
        %v633 = vsel %vm447, %v606, 0
        %v635 = vsel %vm447, %v607, 0
        %v637 = vsel %vm447, %v608, 0
        %v639 = vsel %vm447, %v609, 0
        %v641 = vsel %vm447, %v610, 0
        %v643 = vsel %vm447, %v611, 0
        %v645 = vsel %vm447, %v612, 0
        %v647 = vsel %vm447, %v613, 0
        %649 = vmatpush.msra.mxu0 0.0
        %650 = vmatpush.msra.mxu0 0.0
        %651 = vmatpush.msra.mxu0 0.0
        %652 = vmatpush.msra.mxu0 0.0
        %653 = vmatpush.msra.mxu0 0.0
        %654 = vmatpush.msra.mxu0 0.0
        %655 = vmatpush.msra.mxu0 0.0
        %656 = vmatpush.msra.mxu0 0.0
        %657 = vmatpush.msra.mxu0 0.0
        %658 = vmatpush.msra.mxu0 0.0
        %659 = vmatpush.msra.mxu0 0.0
        %660 = vmatpush.msra.mxu0 0.0
        %661 = vmatpush.msra.mxu0 0.0
        %662 = vmatpush.msra.mxu0 0.0
        %663 = vmatpush.msra.mxu0 0.0
        %664 = vmatpush.msra.mxu0 %v617
        %665 = vmatmul.f32.gmra.mxu0 %v615
        %v666 = vpop.f32.mrf.mxu0
        %v667 = vadd.f32 %v515, %v666
        %668 = vdwg.mxu0
        %669 = vmatpush.msra.mxu0 0.0
        %670 = vmatpush.msra.mxu0 0.0
        %671 = vmatpush.msra.mxu0 0.0
        %672 = vmatpush.msra.mxu0 0.0
        %673 = vmatpush.msra.mxu0 0.0
        %674 = vmatpush.msra.mxu0 0.0
        %675 = vmatpush.msra.mxu0 0.0
        %676 = vmatpush.msra.mxu0 0.0
        %677 = vmatpush.msra.mxu0 0.0
        %678 = vmatpush.msra.mxu0 0.0
        %679 = vmatpush.msra.mxu0 0.0
        %680 = vmatpush.msra.mxu0 0.0
        %681 = vmatpush.msra.mxu0 0.0
        %682 = vmatpush.msra.mxu0 0.0
        %683 = vmatpush.msra.mxu0 0.0
        %684 = vmatpush.msra.mxu0 %v619
        %685 = vmatmul.f32.gmra.mxu0 %v615
        %v686 = vpop.f32.mrf.mxu0
        %v687 = vadd.f32 %v516, %v686
        %688 = vdwg.mxu0
        %689 = vmatpush.msra.mxu0 0.0
        %690 = vmatpush.msra.mxu0 0.0
        %691 = vmatpush.msra.mxu0 0.0
        %692 = vmatpush.msra.mxu0 0.0
        %693 = vmatpush.msra.mxu0 0.0
        %694 = vmatpush.msra.mxu0 0.0
        %695 = vmatpush.msra.mxu0 0.0
        %696 = vmatpush.msra.mxu0 0.0
        %697 = vmatpush.msra.mxu0 0.0
        %698 = vmatpush.msra.mxu0 0.0
        %699 = vmatpush.msra.mxu0 0.0
        %700 = vmatpush.msra.mxu0 0.0
        %701 = vmatpush.msra.mxu0 0.0
        %702 = vmatpush.msra.mxu0 0.0
        %703 = vmatpush.msra.mxu0 0.0
        %704 = vmatpush.msra.mxu0 %v621
        %705 = vmatmul.f32.gmra.mxu0 %v615
        %v706 = vpop.f32.mrf.mxu0
        %v707 = vadd.f32 %v517, %v706
        %708 = vdwg.mxu0
        %709 = vmatpush.msra.mxu0 0.0
        %710 = vmatpush.msra.mxu0 0.0
        %711 = vmatpush.msra.mxu0 0.0
        %712 = vmatpush.msra.mxu0 0.0
        %713 = vmatpush.msra.mxu0 0.0
        %714 = vmatpush.msra.mxu0 0.0
        %715 = vmatpush.msra.mxu0 0.0
        %716 = vmatpush.msra.mxu0 0.0
        %717 = vmatpush.msra.mxu0 0.0
        %718 = vmatpush.msra.mxu0 0.0
        %719 = vmatpush.msra.mxu0 0.0
        %720 = vmatpush.msra.mxu0 0.0
        %721 = vmatpush.msra.mxu0 0.0
        %722 = vmatpush.msra.mxu0 0.0
        %723 = vmatpush.msra.mxu0 0.0
        %724 = vmatpush.msra.mxu0 %v623
        %725 = vmatmul.f32.gmra.mxu0 %v615
        %v726 = vpop.f32.mrf.mxu0
        %v727 = vadd.f32 %v518, %v726
        %728 = vdwg.mxu0
        %729 = vmatpush.msra.mxu0 0.0
        %730 = vmatpush.msra.mxu0 0.0
        %731 = vmatpush.msra.mxu0 0.0
        %732 = vmatpush.msra.mxu0 0.0
        %733 = vmatpush.msra.mxu0 0.0
        %734 = vmatpush.msra.mxu0 0.0
        %735 = vmatpush.msra.mxu0 0.0
        %736 = vmatpush.msra.mxu0 0.0
        %737 = vmatpush.msra.mxu0 0.0
        %738 = vmatpush.msra.mxu0 0.0
        %739 = vmatpush.msra.mxu0 0.0
        %740 = vmatpush.msra.mxu0 0.0
        %741 = vmatpush.msra.mxu0 0.0
        %742 = vmatpush.msra.mxu0 0.0
        %743 = vmatpush.msra.mxu0 0.0
        %744 = vmatpush.msra.mxu0 %v625
        %745 = vmatmul.f32.gmra.mxu0 %v615
        %v746 = vpop.f32.mrf.mxu0
        %v747 = vadd.f32 %v519, %v746
        %748 = vdwg.mxu0
        %749 = vmatpush.msra.mxu0 0.0
        %750 = vmatpush.msra.mxu0 0.0
        %751 = vmatpush.msra.mxu0 0.0
        %752 = vmatpush.msra.mxu0 0.0
        %753 = vmatpush.msra.mxu0 0.0
        %754 = vmatpush.msra.mxu0 0.0
        %755 = vmatpush.msra.mxu0 0.0
        %756 = vmatpush.msra.mxu0 0.0
        %757 = vmatpush.msra.mxu0 0.0
        %758 = vmatpush.msra.mxu0 0.0
        %759 = vmatpush.msra.mxu0 0.0
        %760 = vmatpush.msra.mxu0 0.0
        %761 = vmatpush.msra.mxu0 0.0
        %762 = vmatpush.msra.mxu0 0.0
        %763 = vmatpush.msra.mxu0 0.0
        %764 = vmatpush.msra.mxu0 %v627
        %765 = vmatmul.f32.gmra.mxu0 %v615
        %v766 = vpop.f32.mrf.mxu0
        %v767 = vadd.f32 %v520, %v766
        %768 = vdwg.mxu0
        %769 = vmatpush.msra.mxu0 0.0
        %770 = vmatpush.msra.mxu0 0.0
        %771 = vmatpush.msra.mxu0 0.0
        %772 = vmatpush.msra.mxu0 0.0
        %773 = vmatpush.msra.mxu0 0.0
        %774 = vmatpush.msra.mxu0 0.0
        %775 = vmatpush.msra.mxu0 0.0
        %776 = vmatpush.msra.mxu0 0.0
        %777 = vmatpush.msra.mxu0 0.0
        %778 = vmatpush.msra.mxu0 0.0
        %779 = vmatpush.msra.mxu0 0.0
        %780 = vmatpush.msra.mxu0 0.0
        %781 = vmatpush.msra.mxu0 0.0
        %782 = vmatpush.msra.mxu0 0.0
        %783 = vmatpush.msra.mxu0 0.0
        %784 = vmatpush.msra.mxu0 %v629
        %785 = vmatmul.f32.gmra.mxu0 %v615
        %v786 = vpop.f32.mrf.mxu0
        %v787 = vadd.f32 %v521, %v786
        %788 = vdwg.mxu0
        %789 = vmatpush.msra.mxu0 0.0
        %790 = vmatpush.msra.mxu0 0.0
        %791 = vmatpush.msra.mxu0 0.0
        %792 = vmatpush.msra.mxu0 0.0
        %793 = vmatpush.msra.mxu0 0.0
        %794 = vmatpush.msra.mxu0 0.0
        %795 = vmatpush.msra.mxu0 0.0
        %796 = vmatpush.msra.mxu0 0.0
        %797 = vmatpush.msra.mxu0 0.0
        %798 = vmatpush.msra.mxu0 0.0
        %799 = vmatpush.msra.mxu0 0.0
        %800 = vmatpush.msra.mxu0 0.0
        %801 = vmatpush.msra.mxu0 0.0
        %802 = vmatpush.msra.mxu0 0.0
        %803 = vmatpush.msra.mxu0 0.0
        %804 = vmatpush.msra.mxu0 %v631
        %805 = vmatmul.f32.gmra.mxu0 %v615
        %v806 = vpop.f32.mrf.mxu0
        %v807 = vadd.f32 %v522, %v806
        %808 = vdwg.mxu0
        %809 = vmatpush.msra.mxu0 0.0
        %810 = vmatpush.msra.mxu0 0.0
        %811 = vmatpush.msra.mxu0 0.0
        %812 = vmatpush.msra.mxu0 0.0
        %813 = vmatpush.msra.mxu0 0.0
        %814 = vmatpush.msra.mxu0 0.0
        %815 = vmatpush.msra.mxu0 0.0
        %816 = vmatpush.msra.mxu0 0.0
        %817 = vmatpush.msra.mxu0 0.0
        %818 = vmatpush.msra.mxu0 0.0
        %819 = vmatpush.msra.mxu0 0.0
        %820 = vmatpush.msra.mxu0 0.0
        %821 = vmatpush.msra.mxu0 0.0
        %822 = vmatpush.msra.mxu0 0.0
        %823 = vmatpush.msra.mxu0 0.0
        %824 = vmatpush.msra.mxu0 %v633
        %825 = vmatmul.f32.gmra.mxu0 %v615
        %v826 = vpop.f32.mrf.mxu0
        %v827 = vadd.f32 %v523, %v826
        %828 = vdwg.mxu0
        %829 = vmatpush.msra.mxu0 0.0
        %830 = vmatpush.msra.mxu0 0.0
        %831 = vmatpush.msra.mxu0 0.0
        %832 = vmatpush.msra.mxu0 0.0
        %833 = vmatpush.msra.mxu0 0.0
        %834 = vmatpush.msra.mxu0 0.0
        %835 = vmatpush.msra.mxu0 0.0
        %836 = vmatpush.msra.mxu0 0.0
        %837 = vmatpush.msra.mxu0 0.0
        %838 = vmatpush.msra.mxu0 0.0
        %839 = vmatpush.msra.mxu0 0.0
        %840 = vmatpush.msra.mxu0 0.0
        %841 = vmatpush.msra.mxu0 0.0
        %842 = vmatpush.msra.mxu0 0.0
        %843 = vmatpush.msra.mxu0 0.0
        %844 = vmatpush.msra.mxu0 %v635
        %845 = vmatmul.f32.gmra.mxu0 %v615
        %v846 = vpop.f32.mrf.mxu0
        %v847 = vadd.f32 %v524, %v846
        %848 = vdwg.mxu0
        %849 = vmatpush.msra.mxu0 0.0
        %850 = vmatpush.msra.mxu0 0.0
        %851 = vmatpush.msra.mxu0 0.0
        %852 = vmatpush.msra.mxu0 0.0
        %853 = vmatpush.msra.mxu0 0.0
        %854 = vmatpush.msra.mxu0 0.0
        %855 = vmatpush.msra.mxu0 0.0
        %856 = vmatpush.msra.mxu0 0.0
        %857 = vmatpush.msra.mxu0 0.0
        %858 = vmatpush.msra.mxu0 0.0
        %859 = vmatpush.msra.mxu0 0.0
        %860 = vmatpush.msra.mxu0 0.0
        %861 = vmatpush.msra.mxu0 0.0
        %862 = vmatpush.msra.mxu0 0.0
        %863 = vmatpush.msra.mxu0 0.0
        %864 = vmatpush.msra.mxu0 %v637
        %865 = vmatmul.f32.gmra.mxu0 %v615
        %v866 = vpop.f32.mrf.mxu0
        %v867 = vadd.f32 %v525, %v866
        %868 = vdwg.mxu0
        %869 = vmatpush.msra.mxu0 0.0
        %870 = vmatpush.msra.mxu0 0.0
        %871 = vmatpush.msra.mxu0 0.0
        %872 = vmatpush.msra.mxu0 0.0
        %873 = vmatpush.msra.mxu0 0.0
        %874 = vmatpush.msra.mxu0 0.0
        %875 = vmatpush.msra.mxu0 0.0
        %876 = vmatpush.msra.mxu0 0.0
        %877 = vmatpush.msra.mxu0 0.0
        %878 = vmatpush.msra.mxu0 0.0
        %879 = vmatpush.msra.mxu0 0.0
        %880 = vmatpush.msra.mxu0 0.0
        %881 = vmatpush.msra.mxu0 0.0
        %882 = vmatpush.msra.mxu0 0.0
        %883 = vmatpush.msra.mxu0 0.0
        %884 = vmatpush.msra.mxu0 %v639
        %885 = vmatmul.f32.gmra.mxu0 %v615
        %v886 = vpop.f32.mrf.mxu0
        %v887 = vadd.f32 %v526, %v886
        %888 = vdwg.mxu0
        %889 = vmatpush.msra.mxu0 0.0
        %890 = vmatpush.msra.mxu0 0.0
        %891 = vmatpush.msra.mxu0 0.0
        %892 = vmatpush.msra.mxu0 0.0
        %893 = vmatpush.msra.mxu0 0.0
        %894 = vmatpush.msra.mxu0 0.0
        %895 = vmatpush.msra.mxu0 0.0
        %896 = vmatpush.msra.mxu0 0.0
        %897 = vmatpush.msra.mxu0 0.0
        %898 = vmatpush.msra.mxu0 0.0
        %899 = vmatpush.msra.mxu0 0.0
        %900 = vmatpush.msra.mxu0 0.0
        %901 = vmatpush.msra.mxu0 0.0
        %902 = vmatpush.msra.mxu0 0.0
        %903 = vmatpush.msra.mxu0 0.0
        %904 = vmatpush.msra.mxu0 %v641
        %905 = vmatmul.f32.gmra.mxu0 %v615
        %v906 = vpop.f32.mrf.mxu0
        %v907 = vadd.f32 %v527, %v906
        %908 = vdwg.mxu0
        %909 = vmatpush.msra.mxu0 0.0
        %910 = vmatpush.msra.mxu0 0.0
        %911 = vmatpush.msra.mxu0 0.0
        %912 = vmatpush.msra.mxu0 0.0
        %913 = vmatpush.msra.mxu0 0.0
        %914 = vmatpush.msra.mxu0 0.0
        %915 = vmatpush.msra.mxu0 0.0
        %916 = vmatpush.msra.mxu0 0.0
        %917 = vmatpush.msra.mxu0 0.0
        %918 = vmatpush.msra.mxu0 0.0
        %919 = vmatpush.msra.mxu0 0.0
        %920 = vmatpush.msra.mxu0 0.0
        %921 = vmatpush.msra.mxu0 0.0
        %922 = vmatpush.msra.mxu0 0.0
        %923 = vmatpush.msra.mxu0 0.0
        %924 = vmatpush.msra.mxu0 %v643
        %925 = vmatmul.f32.gmra.mxu0 %v615
        %v926 = vpop.f32.mrf.mxu0
        %v927 = vadd.f32 %v528, %v926
        %928 = vdwg.mxu0
        %929 = vmatpush.msra.mxu0 0.0
        %930 = vmatpush.msra.mxu0 0.0
        %931 = vmatpush.msra.mxu0 0.0
        %932 = vmatpush.msra.mxu0 0.0
        %933 = vmatpush.msra.mxu0 0.0
        %934 = vmatpush.msra.mxu0 0.0
        %935 = vmatpush.msra.mxu0 0.0
        %936 = vmatpush.msra.mxu0 0.0
        %937 = vmatpush.msra.mxu0 0.0
        %938 = vmatpush.msra.mxu0 0.0
        %939 = vmatpush.msra.mxu0 0.0
        %940 = vmatpush.msra.mxu0 0.0
        %941 = vmatpush.msra.mxu0 0.0
        %942 = vmatpush.msra.mxu0 0.0
        %943 = vmatpush.msra.mxu0 0.0
        %944 = vmatpush.msra.mxu0 %v645
        %945 = vmatmul.f32.gmra.mxu0 %v615
        %v946 = vpop.f32.mrf.mxu0
        %v947 = vadd.f32 %v529, %v946
        %948 = vdwg.mxu0
        %949 = vmatpush.msra.mxu0 0.0
        %950 = vmatpush.msra.mxu0 0.0
        %951 = vmatpush.msra.mxu0 0.0
        %952 = vmatpush.msra.mxu0 0.0
        %953 = vmatpush.msra.mxu0 0.0
        %954 = vmatpush.msra.mxu0 0.0
        %955 = vmatpush.msra.mxu0 0.0
        %956 = vmatpush.msra.mxu0 0.0
        %957 = vmatpush.msra.mxu0 0.0
        %958 = vmatpush.msra.mxu0 0.0
        %959 = vmatpush.msra.mxu0 0.0
        %960 = vmatpush.msra.mxu0 0.0
        %961 = vmatpush.msra.mxu0 0.0
        %962 = vmatpush.msra.mxu0 0.0
        %963 = vmatpush.msra.mxu0 0.0
        %964 = vmatpush.msra.mxu0 %v647
        %965 = vmatmul.f32.gmra.mxu0 %v615
        %v966 = vpop.f32.mrf.mxu0
        %v967 = vadd.f32 %v530, %v966
        %968 = vdwg.mxu0
        %v969 = vld [vmem:[%s386] sm:$0x7f]
        %v970 = vld [vmem:[%s386 + $0x8] sm:$0x7f]
        %v971 = vld [vmem:[%s386 + $0x10] sm:$0x7f]
        %v972 = vld [vmem:[%s386 + $0x18] sm:$0x7f]
        %v973 = vld [vmem:[%s386 + $0x20] sm:$0x7f]
        %v974 = vld [vmem:[%s386 + $0x28] sm:$0x7f]
        %v975 = vld [vmem:[%s386 + $0x30] sm:$0x7f]
        %v976 = vld [vmem:[%s386 + $0x38] sm:$0x7f]
        %vm977 = vcmask 522240
        %v978 = vsel %vm977, %v969, 0.0
        %979 = vadd.xlane.f32.xlu0 %v978
        %v980 = vpop.xlane.xlu0 %979
        %v981 = vsel %vm977, %v970, 0.0
        %982 = vadd.xlane.f32.xlu0 %v981
        %v983 = vpop.xlane.xlu0 %982
        %v984 = vsel %vm977, %v971, 0.0
        %985 = vadd.xlane.f32.xlu0 %v984
        %v986 = vpop.xlane.xlu0 %985
        %v987 = vsel %vm977, %v972, 0.0
        %988 = vadd.xlane.f32.xlu0 %v987
        %v989 = vpop.xlane.xlu0 %988
        %v990 = vsel %vm977, %v973, 0.0
        %991 = vadd.xlane.f32.xlu0 %v990
        %v992 = vpop.xlane.xlu0 %991
        %v993 = vsel %vm977, %v974, 0.0
        %994 = vadd.xlane.f32.xlu0 %v993
        %v995 = vpop.xlane.xlu0 %994
        %v996 = vsel %vm977, %v975, 0.0
        %997 = vadd.xlane.f32.xlu0 %v996
        %v998 = vpop.xlane.xlu0 %997
        %v999 = vsel %vm977, %v976, 0.0
        %1000 = vadd.xlane.f32.xlu0 %v999
        %v1001 = vpop.xlane.xlu0 %1000
        %v1002 = vrcp.pop 64.0
        %v1003 = vmul.f32 64.0, %v1002
        %v1004 = vsub.f32 1.0, %v1003
        %v1005 = vmul.f32 %v1002, %v1004
        %v1006 = vadd.f32 %v1002, %v1005
        %vm1007 = vweird.f32 %v1002
        %v1008 = vsel %vm1007, %v1002, %v1006
        %v1009 = vmul.f32 %v980, %v1008
        %v1010 = vmul.f32 %v983, %v1008
        %v1011 = vmul.f32 %v986, %v1008
        %v1012 = vmul.f32 %v989, %v1008
        %v1013 = vmul.f32 %v992, %v1008
        %v1014 = vmul.f32 %v995, %v1008
        %v1015 = vmul.f32 %v998, %v1008
        %v1016 = vmul.f32 %v1001, %v1008
        %v1017 = vld [vmem:[#allocation5] sm:$0x7f]
        %v1018 = vld [vmem:[#allocation5 + $0x8] sm:$0x7f]
        %v1019 = vld [vmem:[%s5] sm:$0x3]
        %v1021 = vperm.slane %v1019, 0
        %v1022 = vperm.slane %v1019, 1
        %v1033 = vperm.slane %v1009, %v556
        %v1034 = vperm.slane %v1010, %v556
        %v1035 = vperm.slane %v1011, %v556
        %v1036 = vperm.slane %v1012, %v556
        %v1037 = vperm.slane %v1013, %v556
        %v1038 = vperm.slane %v1014, %v556
        %v1039 = vperm.slane %v1015, %v556
        %v1040 = vperm.slane %v1016, %v556
        %v1041 = vsel %vm565, %v1034, %v1033
        %v1042 = vsel %vm567, %v1035, %v1041
        %v1043 = vsel %vm569, %v1036, %v1042
        %v1044 = vsel %vm571, %v1037, %v1043
        %v1045 = vsel %vm573, %v1038, %v1044
        %v1046 = vsel %vm575, %v1039, %v1045
        %v1047 = vsel %vm577, %v1040, %v1046
        %vm1048 = vcmask 56320
        %v1049 = vsel %vm1048, %v1047, 0
        %vm1051 = vcmask 1046528
        %v1053 = vsel %vm1051, %v1017, 0
        %v1056 = vsel %vm1051, %v1018, 0
        %1058 = vmatpush.msra.mxu0 0.0
        %1059 = vmatpush.msra.mxu0 0.0
        %1060 = vmatpush.msra.mxu0 0.0
        %1061 = vmatpush.msra.mxu0 0.0
        %1062 = vmatpush.msra.mxu0 0.0
        %1063 = vmatpush.msra.mxu0 0.0
        %1064 = vmatpush.msra.mxu0 0.0
        %1065 = vmatpush.msra.mxu0 0.0
        %1066 = vmatpush.msra.mxu0 0.0
        %1067 = vmatpush.msra.mxu0 0.0
        %1068 = vmatpush.msra.mxu0 0.0
        %1069 = vmatpush.msra.mxu0 0.0
        %1070 = vmatpush.msra.mxu0 0.0
        %1071 = vmatpush.msra.mxu0 0.0
        %1072 = vmatpush.msra.mxu0 0.0
        %1073 = vmatpush.msra.mxu0 %v1053
        %1074 = vmatmul.f32.gmra.mxu0 %v1049
        %v1075 = vpop.f32.mrf.mxu0
        %v1076 = vadd.f32 %v1021, %v1075
        %1077 = vdwg.mxu0
        %1078 = vmatpush.msra.mxu0 0.0
        %1079 = vmatpush.msra.mxu0 0.0
        %1080 = vmatpush.msra.mxu0 0.0
        %1081 = vmatpush.msra.mxu0 0.0
        %1082 = vmatpush.msra.mxu0 0.0
        %1083 = vmatpush.msra.mxu0 0.0
        %1084 = vmatpush.msra.mxu0 0.0
        %1085 = vmatpush.msra.mxu0 0.0
        %1086 = vmatpush.msra.mxu0 0.0
        %1087 = vmatpush.msra.mxu0 0.0
        %1088 = vmatpush.msra.mxu0 0.0
        %1089 = vmatpush.msra.mxu0 0.0
        %1090 = vmatpush.msra.mxu0 0.0
        %1091 = vmatpush.msra.mxu0 0.0
        %1092 = vmatpush.msra.mxu0 0.0
        %1093 = vmatpush.msra.mxu0 %v1056
        %1094 = vmatmul.f32.gmra.mxu0 %v1049
        %v1095 = vpop.f32.mrf.mxu0
        %v1096 = vadd.f32 %v1022, %v1095
        %1097 = vdwg.mxu0
        %v1098 = vld [vmem:[%s6] sm:$0xff]
        %v1099 = vld [vmem:[%s6 + $0x8] sm:$0xff]
        %v1100 = vld [vmem:[%s6 + $0x10] sm:$0xff]
        %v1101 = vld [vmem:[%s6 + $0x18] sm:$0xff]
        %v1102 = vld [vmem:[%s6 + $0x20] sm:$0xff]
        %v1103 = vld [vmem:[%s6 + $0x28] sm:$0xff]
        %v1104 = vld [vmem:[%s6 + $0x30] sm:$0xff]
        %v1105 = vld [vmem:[%s6 + $0x38] sm:$0xff]
        %v1106 = vld [vmem:[%s6 + $0x40] sm:$0xff]
        %v1107 = vld [vmem:[%s6 + $0x48] sm:$0xff]
        %v1108 = vld [vmem:[%s6 + $0x50] sm:$0xff]
        %v1109 = vld [vmem:[%s6 + $0x58] sm:$0xff]
        %v1110 = vld [vmem:[%s6 + $0x60] sm:$0xff]
        %v1111 = vld [vmem:[%s6 + $0x68] sm:$0xff]
        %v1112 = vld [vmem:[%s6 + $0x70] sm:$0xff]
        %v1113 = vld [vmem:[%s6 + $0x78] sm:$0xff]
        %v1114 = vld [vmem:[%s6 + $0x80] sm:$0x1]
        %v1115 = vld [vmem:[%s6 + $0x88] sm:$0x1]
        %v1116 = vld [vmem:[%s6 + $0x90] sm:$0x1]
        %v1117 = vld [vmem:[%s6 + $0x98] sm:$0x1]
        %v1118 = vld [vmem:[%s6 + $0xa0] sm:$0x1]
        %v1119 = vld [vmem:[%s6 + $0xa8] sm:$0x1]
        %v1120 = vld [vmem:[%s6 + $0xb0] sm:$0x1]
        %v1121 = vld [vmem:[%s6 + $0xb8] sm:$0x1]
        %v1122 = vld [vmem:[%s6 + $0xc0] sm:$0x1]
        %v1123 = vld [vmem:[%s6 + $0xc8] sm:$0x1]
        %v1124 = vld [vmem:[%s6 + $0xd0] sm:$0x1]
        %v1125 = vld [vmem:[%s6 + $0xd8] sm:$0x1]
        %v1126 = vld [vmem:[%s6 + $0xe0] sm:$0x1]
        %v1127 = vld [vmem:[%s6 + $0xe8] sm:$0x1]
        %v1128 = vld [vmem:[%s6 + $0xf0] sm:$0x1]
        %v1129 = vld [vmem:[%s6 + $0xf8] sm:$0x1]
        %v1130 = vld [vmem:[%s7] sm:$0xff]
        %v1131 = vld [vmem:[%s7 + $0x8] sm:$0xff]
        %v1132 = vld [vmem:[%s7 + $0x10] sm:$0x1]
        %v1133 = vld [vmem:[%s7 + $0x18] sm:$0x1]
        %1134 = vmatpush.xpose.msra.mxu0 0.0
        %1135 = vmatpush.xpose.msra.mxu0 0.0
        %1136 = vmatpush.xpose.msra.mxu0 0.0
        %1137 = vmatpush.xpose.msra.mxu0 0.0
        %1138 = vmatpush.xpose.msra.mxu0 0.0
        %1139 = vmatpush.xpose.msra.mxu0 0.0
        %1140 = vmatpush.xpose.msra.mxu0 0.0
        %1141 = vmatpush.xpose.msra.mxu0 0.0
        %1142 = vmatpush.xpose.msra.mxu0 0.0
        %1143 = vmatpush.xpose.msra.mxu0 0.0
        %1144 = vmatpush.xpose.msra.mxu0 0.0
        %1145 = vmatpush.xpose.msra.mxu0 0.0
        %1146 = vmatpush.xpose.msra.mxu0 0.0
        %1147 = vmatpush.xpose.msra.mxu0 0.0
        %1148 = vmatpush.xpose.msra.mxu0 %v1132
        %1149 = vmatpush.xpose.msra.mxu0 %v1130
        %1150 = vmatmul.f32.gmra.mxu0 %v1076
        %v1151 = vpop.f32.mrf.mxu0
        %v1152 = vadd.f32 0.0, %v1151
        %1153 = vdwg.mxu0
        %1154 = vmatpush.xpose.msra.mxu0 0.0
        %1155 = vmatpush.xpose.msra.mxu0 0.0
        %1156 = vmatpush.xpose.msra.mxu0 0.0
        %1157 = vmatpush.xpose.msra.mxu0 0.0
        %1158 = vmatpush.xpose.msra.mxu0 0.0
        %1159 = vmatpush.xpose.msra.mxu0 0.0
        %1160 = vmatpush.xpose.msra.mxu0 0.0
        %1161 = vmatpush.xpose.msra.mxu0 0.0
        %1162 = vmatpush.xpose.msra.mxu0 0.0
        %1163 = vmatpush.xpose.msra.mxu0 0.0
        %1164 = vmatpush.xpose.msra.mxu0 0.0
        %1165 = vmatpush.xpose.msra.mxu0 0.0
        %1166 = vmatpush.xpose.msra.mxu0 0.0
        %1167 = vmatpush.xpose.msra.mxu0 0.0
        %1168 = vmatpush.xpose.msra.mxu0 %v1133
        %1169 = vmatpush.xpose.msra.mxu0 %v1131
        %1170 = vmatmul.f32.gmra.mxu0 %v1096
        %v1171 = vpop.f32.mrf.mxu0
        %v1172 = vadd.f32 %v1152, %v1171
        %1173 = vdwg.mxu0
        %1174 = vmatpush.xpose.msra.mxu0 0.0
        %1175 = vmatpush.xpose.msra.mxu0 0.0
        %1176 = vmatpush.xpose.msra.mxu0 0.0
        %1177 = vmatpush.xpose.msra.mxu0 0.0
        %1178 = vmatpush.xpose.msra.mxu0 0.0
        %1179 = vmatpush.xpose.msra.mxu0 0.0
        %1180 = vmatpush.xpose.msra.mxu0 0.0
        %1181 = vmatpush.xpose.msra.mxu0 0.0
        %1182 = vmatpush.xpose.msra.mxu0 0.0
        %1183 = vmatpush.xpose.msra.mxu0 0.0
        %1184 = vmatpush.xpose.msra.mxu0 0.0
        %1185 = vmatpush.xpose.msra.mxu0 0.0
        %1186 = vmatpush.xpose.msra.mxu0 0.0
        %1187 = vmatpush.xpose.msra.mxu0 0.0
        %1188 = vmatpush.xpose.msra.mxu0 %v1114
        %1189 = vmatpush.xpose.msra.mxu0 %v1098
        %1190 = vmatmul.f32.gmra.mxu0 %v667
        %v1191 = vpop.f32.mrf.mxu0
        %v1192 = vadd.f32 %v1172, %v1191
        %1193 = vdwg.mxu0
        %1194 = vmatpush.xpose.msra.mxu0 0.0
        %1195 = vmatpush.xpose.msra.mxu0 0.0
        %1196 = vmatpush.xpose.msra.mxu0 0.0
        %1197 = vmatpush.xpose.msra.mxu0 0.0
        %1198 = vmatpush.xpose.msra.mxu0 0.0
        %1199 = vmatpush.xpose.msra.mxu0 0.0
        %1200 = vmatpush.xpose.msra.mxu0 0.0
        %1201 = vmatpush.xpose.msra.mxu0 0.0
        %1202 = vmatpush.xpose.msra.mxu0 0.0
        %1203 = vmatpush.xpose.msra.mxu0 0.0
        %1204 = vmatpush.xpose.msra.mxu0 0.0
        %1205 = vmatpush.xpose.msra.mxu0 0.0
        %1206 = vmatpush.xpose.msra.mxu0 0.0
        %1207 = vmatpush.xpose.msra.mxu0 0.0
        %1208 = vmatpush.xpose.msra.mxu0 %v1115
        %1209 = vmatpush.xpose.msra.mxu0 %v1099
        %1210 = vmatmul.f32.gmra.mxu0 %v687
        %v1211 = vpop.f32.mrf.mxu0
        %v1212 = vadd.f32 %v1192, %v1211
        %1213 = vdwg.mxu0
        %1214 = vmatpush.xpose.msra.mxu0 0.0
        %1215 = vmatpush.xpose.msra.mxu0 0.0
        %1216 = vmatpush.xpose.msra.mxu0 0.0
        %1217 = vmatpush.xpose.msra.mxu0 0.0
        %1218 = vmatpush.xpose.msra.mxu0 0.0
        %1219 = vmatpush.xpose.msra.mxu0 0.0
        %1220 = vmatpush.xpose.msra.mxu0 0.0
        %1221 = vmatpush.xpose.msra.mxu0 0.0
        %1222 = vmatpush.xpose.msra.mxu0 0.0
        %1223 = vmatpush.xpose.msra.mxu0 0.0
        %1224 = vmatpush.xpose.msra.mxu0 0.0
        %1225 = vmatpush.xpose.msra.mxu0 0.0
        %1226 = vmatpush.xpose.msra.mxu0 0.0
        %1227 = vmatpush.xpose.msra.mxu0 0.0
        %1228 = vmatpush.xpose.msra.mxu0 %v1116
        %1229 = vmatpush.xpose.msra.mxu0 %v1100
        %1230 = vmatmul.f32.gmra.mxu0 %v707
        %v1231 = vpop.f32.mrf.mxu0
        %v1232 = vadd.f32 %v1212, %v1231
        %1233 = vdwg.mxu0
        %1234 = vmatpush.xpose.msra.mxu0 0.0
        %1235 = vmatpush.xpose.msra.mxu0 0.0
        %1236 = vmatpush.xpose.msra.mxu0 0.0
        %1237 = vmatpush.xpose.msra.mxu0 0.0
        %1238 = vmatpush.xpose.msra.mxu0 0.0
        %1239 = vmatpush.xpose.msra.mxu0 0.0
        %1240 = vmatpush.xpose.msra.mxu0 0.0
        %1241 = vmatpush.xpose.msra.mxu0 0.0
        %1242 = vmatpush.xpose.msra.mxu0 0.0
        %1243 = vmatpush.xpose.msra.mxu0 0.0
        %1244 = vmatpush.xpose.msra.mxu0 0.0
        %1245 = vmatpush.xpose.msra.mxu0 0.0
        %1246 = vmatpush.xpose.msra.mxu0 0.0
        %1247 = vmatpush.xpose.msra.mxu0 0.0
        %1248 = vmatpush.xpose.msra.mxu0 %v1117
        %1249 = vmatpush.xpose.msra.mxu0 %v1101
        %1250 = vmatmul.f32.gmra.mxu0 %v727
        %v1251 = vpop.f32.mrf.mxu0
        %v1252 = vadd.f32 %v1232, %v1251
        %1253 = vdwg.mxu0
        %1254 = vmatpush.xpose.msra.mxu0 0.0
        %1255 = vmatpush.xpose.msra.mxu0 0.0
        %1256 = vmatpush.xpose.msra.mxu0 0.0
        %1257 = vmatpush.xpose.msra.mxu0 0.0
        %1258 = vmatpush.xpose.msra.mxu0 0.0
        %1259 = vmatpush.xpose.msra.mxu0 0.0
        %1260 = vmatpush.xpose.msra.mxu0 0.0
        %1261 = vmatpush.xpose.msra.mxu0 0.0
        %1262 = vmatpush.xpose.msra.mxu0 0.0
        %1263 = vmatpush.xpose.msra.mxu0 0.0
        %1264 = vmatpush.xpose.msra.mxu0 0.0
        %1265 = vmatpush.xpose.msra.mxu0 0.0
        %1266 = vmatpush.xpose.msra.mxu0 0.0
        %1267 = vmatpush.xpose.msra.mxu0 0.0
        %1268 = vmatpush.xpose.msra.mxu0 %v1118
        %1269 = vmatpush.xpose.msra.mxu0 %v1102
        %1270 = vmatmul.f32.gmra.mxu0 %v747
        %v1271 = vpop.f32.mrf.mxu0
        %v1272 = vadd.f32 %v1252, %v1271
        %1273 = vdwg.mxu0
        %1274 = vmatpush.xpose.msra.mxu0 0.0
        %1275 = vmatpush.xpose.msra.mxu0 0.0
        %1276 = vmatpush.xpose.msra.mxu0 0.0
        %1277 = vmatpush.xpose.msra.mxu0 0.0
        %1278 = vmatpush.xpose.msra.mxu0 0.0
        %1279 = vmatpush.xpose.msra.mxu0 0.0
        %1280 = vmatpush.xpose.msra.mxu0 0.0
        %1281 = vmatpush.xpose.msra.mxu0 0.0
        %1282 = vmatpush.xpose.msra.mxu0 0.0
        %1283 = vmatpush.xpose.msra.mxu0 0.0
        %1284 = vmatpush.xpose.msra.mxu0 0.0
        %1285 = vmatpush.xpose.msra.mxu0 0.0
        %1286 = vmatpush.xpose.msra.mxu0 0.0
        %1287 = vmatpush.xpose.msra.mxu0 0.0
        %1288 = vmatpush.xpose.msra.mxu0 %v1119
        %1289 = vmatpush.xpose.msra.mxu0 %v1103
        %1290 = vmatmul.f32.gmra.mxu0 %v767
        %v1291 = vpop.f32.mrf.mxu0
        %v1292 = vadd.f32 %v1272, %v1291
        %1293 = vdwg.mxu0
        %1294 = vmatpush.xpose.msra.mxu0 0.0
        %1295 = vmatpush.xpose.msra.mxu0 0.0
        %1296 = vmatpush.xpose.msra.mxu0 0.0
        %1297 = vmatpush.xpose.msra.mxu0 0.0
        %1298 = vmatpush.xpose.msra.mxu0 0.0
        %1299 = vmatpush.xpose.msra.mxu0 0.0
        %1300 = vmatpush.xpose.msra.mxu0 0.0
        %1301 = vmatpush.xpose.msra.mxu0 0.0
        %1302 = vmatpush.xpose.msra.mxu0 0.0
        %1303 = vmatpush.xpose.msra.mxu0 0.0
        %1304 = vmatpush.xpose.msra.mxu0 0.0
        %1305 = vmatpush.xpose.msra.mxu0 0.0
        %1306 = vmatpush.xpose.msra.mxu0 0.0
        %1307 = vmatpush.xpose.msra.mxu0 0.0
        %1308 = vmatpush.xpose.msra.mxu0 %v1120
        %1309 = vmatpush.xpose.msra.mxu0 %v1104
        %1310 = vmatmul.f32.gmra.mxu0 %v787
        %v1311 = vpop.f32.mrf.mxu0
        %v1312 = vadd.f32 %v1292, %v1311
        %1313 = vdwg.mxu0
        %1314 = vmatpush.xpose.msra.mxu0 0.0
        %1315 = vmatpush.xpose.msra.mxu0 0.0
        %1316 = vmatpush.xpose.msra.mxu0 0.0
        %1317 = vmatpush.xpose.msra.mxu0 0.0
        %1318 = vmatpush.xpose.msra.mxu0 0.0
        %1319 = vmatpush.xpose.msra.mxu0 0.0
        %1320 = vmatpush.xpose.msra.mxu0 0.0
        %1321 = vmatpush.xpose.msra.mxu0 0.0
        %1322 = vmatpush.xpose.msra.mxu0 0.0
        %1323 = vmatpush.xpose.msra.mxu0 0.0
        %1324 = vmatpush.xpose.msra.mxu0 0.0
        %1325 = vmatpush.xpose.msra.mxu0 0.0
        %1326 = vmatpush.xpose.msra.mxu0 0.0
        %1327 = vmatpush.xpose.msra.mxu0 0.0
        %1328 = vmatpush.xpose.msra.mxu0 %v1121
        %1329 = vmatpush.xpose.msra.mxu0 %v1105
        %1330 = vmatmul.f32.gmra.mxu0 %v807
        %v1331 = vpop.f32.mrf.mxu0
        %v1332 = vadd.f32 %v1312, %v1331
        %1333 = vdwg.mxu0
        %1334 = vmatpush.xpose.msra.mxu0 0.0
        %1335 = vmatpush.xpose.msra.mxu0 0.0
        %1336 = vmatpush.xpose.msra.mxu0 0.0
        %1337 = vmatpush.xpose.msra.mxu0 0.0
        %1338 = vmatpush.xpose.msra.mxu0 0.0
        %1339 = vmatpush.xpose.msra.mxu0 0.0
        %1340 = vmatpush.xpose.msra.mxu0 0.0
        %1341 = vmatpush.xpose.msra.mxu0 0.0
        %1342 = vmatpush.xpose.msra.mxu0 0.0
        %1343 = vmatpush.xpose.msra.mxu0 0.0
        %1344 = vmatpush.xpose.msra.mxu0 0.0
        %1345 = vmatpush.xpose.msra.mxu0 0.0
        %1346 = vmatpush.xpose.msra.mxu0 0.0
        %1347 = vmatpush.xpose.msra.mxu0 0.0
        %1348 = vmatpush.xpose.msra.mxu0 %v1122
        %1349 = vmatpush.xpose.msra.mxu0 %v1106
        %1350 = vmatmul.f32.gmra.mxu0 %v827
        %v1351 = vpop.f32.mrf.mxu0
        %v1352 = vadd.f32 %v1332, %v1351
        %1353 = vdwg.mxu0
        %1354 = vmatpush.xpose.msra.mxu0 0.0
        %1355 = vmatpush.xpose.msra.mxu0 0.0
        %1356 = vmatpush.xpose.msra.mxu0 0.0
        %1357 = vmatpush.xpose.msra.mxu0 0.0
        %1358 = vmatpush.xpose.msra.mxu0 0.0
        %1359 = vmatpush.xpose.msra.mxu0 0.0
        %1360 = vmatpush.xpose.msra.mxu0 0.0
        %1361 = vmatpush.xpose.msra.mxu0 0.0
        %1362 = vmatpush.xpose.msra.mxu0 0.0
        %1363 = vmatpush.xpose.msra.mxu0 0.0
        %1364 = vmatpush.xpose.msra.mxu0 0.0
        %1365 = vmatpush.xpose.msra.mxu0 0.0
        %1366 = vmatpush.xpose.msra.mxu0 0.0
        %1367 = vmatpush.xpose.msra.mxu0 0.0
        %1368 = vmatpush.xpose.msra.mxu0 %v1123
        %1369 = vmatpush.xpose.msra.mxu0 %v1107
        %1370 = vmatmul.f32.gmra.mxu0 %v847
        %v1371 = vpop.f32.mrf.mxu0
        %v1372 = vadd.f32 %v1352, %v1371
        %1373 = vdwg.mxu0
        %1374 = vmatpush.xpose.msra.mxu0 0.0
        %1375 = vmatpush.xpose.msra.mxu0 0.0
        %1376 = vmatpush.xpose.msra.mxu0 0.0
        %1377 = vmatpush.xpose.msra.mxu0 0.0
        %1378 = vmatpush.xpose.msra.mxu0 0.0
        %1379 = vmatpush.xpose.msra.mxu0 0.0
        %1380 = vmatpush.xpose.msra.mxu0 0.0
        %1381 = vmatpush.xpose.msra.mxu0 0.0
        %1382 = vmatpush.xpose.msra.mxu0 0.0
        %1383 = vmatpush.xpose.msra.mxu0 0.0
        %1384 = vmatpush.xpose.msra.mxu0 0.0
        %1385 = vmatpush.xpose.msra.mxu0 0.0
        %1386 = vmatpush.xpose.msra.mxu0 0.0
        %1387 = vmatpush.xpose.msra.mxu0 0.0
        %1388 = vmatpush.xpose.msra.mxu0 %v1124
        %1389 = vmatpush.xpose.msra.mxu0 %v1108
        %1390 = vmatmul.f32.gmra.mxu0 %v867
        %v1391 = vpop.f32.mrf.mxu0
        %v1392 = vadd.f32 %v1372, %v1391
        %1393 = vdwg.mxu0
        %1394 = vmatpush.xpose.msra.mxu0 0.0
        %1395 = vmatpush.xpose.msra.mxu0 0.0
        %1396 = vmatpush.xpose.msra.mxu0 0.0
        %1397 = vmatpush.xpose.msra.mxu0 0.0
        %1398 = vmatpush.xpose.msra.mxu0 0.0
        %1399 = vmatpush.xpose.msra.mxu0 0.0
        %1400 = vmatpush.xpose.msra.mxu0 0.0
        %1401 = vmatpush.xpose.msra.mxu0 0.0
        %1402 = vmatpush.xpose.msra.mxu0 0.0
        %1403 = vmatpush.xpose.msra.mxu0 0.0
        %1404 = vmatpush.xpose.msra.mxu0 0.0
        %1405 = vmatpush.xpose.msra.mxu0 0.0
        %1406 = vmatpush.xpose.msra.mxu0 0.0
        %1407 = vmatpush.xpose.msra.mxu0 0.0
        %1408 = vmatpush.xpose.msra.mxu0 %v1125
        %1409 = vmatpush.xpose.msra.mxu0 %v1109
        %1410 = vmatmul.f32.gmra.mxu0 %v887
        %v1411 = vpop.f32.mrf.mxu0
        %v1412 = vadd.f32 %v1392, %v1411
        %1413 = vdwg.mxu0
        %1414 = vmatpush.xpose.msra.mxu0 0.0
        %1415 = vmatpush.xpose.msra.mxu0 0.0
        %1416 = vmatpush.xpose.msra.mxu0 0.0
        %1417 = vmatpush.xpose.msra.mxu0 0.0
        %1418 = vmatpush.xpose.msra.mxu0 0.0
        %1419 = vmatpush.xpose.msra.mxu0 0.0
        %1420 = vmatpush.xpose.msra.mxu0 0.0
        %1421 = vmatpush.xpose.msra.mxu0 0.0
        %1422 = vmatpush.xpose.msra.mxu0 0.0
        %1423 = vmatpush.xpose.msra.mxu0 0.0
        %1424 = vmatpush.xpose.msra.mxu0 0.0
        %1425 = vmatpush.xpose.msra.mxu0 0.0
        %1426 = vmatpush.xpose.msra.mxu0 0.0
        %1427 = vmatpush.xpose.msra.mxu0 0.0
        %1428 = vmatpush.xpose.msra.mxu0 %v1126
        %1429 = vmatpush.xpose.msra.mxu0 %v1110
        %1430 = vmatmul.f32.gmra.mxu0 %v907
        %v1431 = vpop.f32.mrf.mxu0
        %v1432 = vadd.f32 %v1412, %v1431
        %1433 = vdwg.mxu0
        %1434 = vmatpush.xpose.msra.mxu0 0.0
        %1435 = vmatpush.xpose.msra.mxu0 0.0
        %1436 = vmatpush.xpose.msra.mxu0 0.0
        %1437 = vmatpush.xpose.msra.mxu0 0.0
        %1438 = vmatpush.xpose.msra.mxu0 0.0
        %1439 = vmatpush.xpose.msra.mxu0 0.0
        %1440 = vmatpush.xpose.msra.mxu0 0.0
        %1441 = vmatpush.xpose.msra.mxu0 0.0
        %1442 = vmatpush.xpose.msra.mxu0 0.0
        %1443 = vmatpush.xpose.msra.mxu0 0.0
        %1444 = vmatpush.xpose.msra.mxu0 0.0
        %1445 = vmatpush.xpose.msra.mxu0 0.0
        %1446 = vmatpush.xpose.msra.mxu0 0.0
        %1447 = vmatpush.xpose.msra.mxu0 0.0
        %1448 = vmatpush.xpose.msra.mxu0 %v1127
        %1449 = vmatpush.xpose.msra.mxu0 %v1111
        %1450 = vmatmul.f32.gmra.mxu0 %v927
        %v1451 = vpop.f32.mrf.mxu0
        %v1452 = vadd.f32 %v1432, %v1451
        %1453 = vdwg.mxu0
        %1454 = vmatpush.xpose.msra.mxu0 0.0
        %1455 = vmatpush.xpose.msra.mxu0 0.0
        %1456 = vmatpush.xpose.msra.mxu0 0.0
        %1457 = vmatpush.xpose.msra.mxu0 0.0
        %1458 = vmatpush.xpose.msra.mxu0 0.0
        %1459 = vmatpush.xpose.msra.mxu0 0.0
        %1460 = vmatpush.xpose.msra.mxu0 0.0
        %1461 = vmatpush.xpose.msra.mxu0 0.0
        %1462 = vmatpush.xpose.msra.mxu0 0.0
        %1463 = vmatpush.xpose.msra.mxu0 0.0
        %1464 = vmatpush.xpose.msra.mxu0 0.0
        %1465 = vmatpush.xpose.msra.mxu0 0.0
        %1466 = vmatpush.xpose.msra.mxu0 0.0
        %1467 = vmatpush.xpose.msra.mxu0 0.0
        %1468 = vmatpush.xpose.msra.mxu0 %v1128
        %1469 = vmatpush.xpose.msra.mxu0 %v1112
        %1470 = vmatmul.f32.gmra.mxu0 %v947
        %v1471 = vpop.f32.mrf.mxu0
        %v1472 = vadd.f32 %v1452, %v1471
        %1473 = vdwg.mxu0
        %1474 = vmatpush.xpose.msra.mxu0 0.0
        %1475 = vmatpush.xpose.msra.mxu0 0.0
        %1476 = vmatpush.xpose.msra.mxu0 0.0
        %1477 = vmatpush.xpose.msra.mxu0 0.0
        %1478 = vmatpush.xpose.msra.mxu0 0.0
        %1479 = vmatpush.xpose.msra.mxu0 0.0
        %1480 = vmatpush.xpose.msra.mxu0 0.0
        %1481 = vmatpush.xpose.msra.mxu0 0.0
        %1482 = vmatpush.xpose.msra.mxu0 0.0
        %1483 = vmatpush.xpose.msra.mxu0 0.0
        %1484 = vmatpush.xpose.msra.mxu0 0.0
        %1485 = vmatpush.xpose.msra.mxu0 0.0
        %1486 = vmatpush.xpose.msra.mxu0 0.0
        %1487 = vmatpush.xpose.msra.mxu0 0.0
        %1488 = vmatpush.xpose.msra.mxu0 %v1129
        %1489 = vmatpush.xpose.msra.mxu0 %v1113
        %1490 = vmatmul.f32.gmra.mxu0 %v967
        %v1491 = vpop.f32.mrf.mxu0
        %v1492 = vadd.f32 %v1472, %v1491
        %1493 = vdwg.mxu0
        %v1494 = vld [vmem:[%s8] sm:$0x1]
        %v1496 = vperm.slane %v1494, 0
        %v1498 = vadd.f32 %v1492, %v1496
        %vm1499 = vcmask 72704
        %1500 = vst.msk [vmem:[%s374] sm:$0xff] %vm1499, %v1498
        %s1501 = sand.u32 %s232, 1
        %s1502 = scalar_lea.sflag [#allocation4], %s1501
        %s1503 = sand.u32 %s232, 1
        %s1504 = smul.addr %s1503, 8
        %s1505 = scalar_lea.vmem [#allocation7], %s1504
        // Predicated region
        $region65: #{tpu_custom_call.1} parent=55 // pred_check
          %p1506 = pneg %p242
        $region66: #{tpu_custom_call.1} parent=55 // pred_check_branch
          %1508 = sbr.rel (%p1506) target = $region68
        $region67: #{tpu_custom_call.1} parent=55 // pred_region
          %1510 = vsyncadd %s1502, 0
          %s1511 = smul.addr %s25, 8
          %s1512 = scalar_lea.hbm %s9, %s1511
          %s1514 = sshll.u32 %s1505, 4
          %s1515 = int_to_ptr.vmem [resolvable:$true] %s1514
          %s1516 = sshll.u32 %s1512, 4
          %s1517 = int_to_ptr.hbm [resolvable:$true] %s1516
          %1519 = dma.vmem_to_hbm [thread:$0]  %s1515, 128, %s1517, %s1502
        $region68: #{tpu_custom_call.1} parent=55 // pred_fallthru
          _
      $region56: #{tpu_custom_call.1} parent=5 // pred_fallthru
        _
      %p1520 = scmp.le.s32.totalorder 2, %s20
      // Predicated region
      $region69: #{tpu_custom_call.1} parent=5 // pred_check
        %p1521 = pneg %p1520
      $region70: #{tpu_custom_call.1} parent=5 // pred_check_branch
        %1523 = sbr.rel (%p1521) target = $region72
      $region71: #{tpu_custom_call.1} parent=5 // pred_region
        %s1524 = ssub.s32 %s20, 2
        // Predicated region
        $region73: #{tpu_custom_call.1} parent=71 // pred_check
          %p1525 = pneg %p248
        $region74: #{tpu_custom_call.1} parent=71 // pred_check_branch
          %1527 = sbr.rel (%p1525) target = $region76
        $region75: #{tpu_custom_call.1} parent=71 // pred_region
          %s1528 = sand.u32 %s233, 1
          %s1529 = scalar_lea.sflag [#allocation4], %s1528
          %s1530 = sand.u32 %s233, 1
          %s1531 = smul.addr %s1530, 8
          %s1532 = scalar_lea.vmem [#allocation7], %s1531
          %1534 = dma.done %s1529, 128
        $region76: #{tpu_custom_call.1} parent=71 // pred_fallthru
          _
      $region72: #{tpu_custom_call.1} parent=5 // pred_fallthru
        _
    $region6: #{tpu_custom_call.1} parent=1 // loop_footer
      %s24 = sadd.s32 1, %s20
    $region7: #{tpu_custom_call.1} parent=1 // loop_footer_branch
      %19 = sbr.rel target = $region3
    $region8: #{tpu_custom_call.1} parent=1 // loop_exit
      _
    %1535 = vsyncpa [#allocation3], 1
    %s1536 = scalar_lea.sflag [#allocation3], 1
    %1537 = vsyncpa %s1536, 1
    %1538 = vsyncpa [#allocation6], 1
    %1539 = vsyncpa [#allocation4], 1
    %s1540 = scalar_lea.sflag [#allocation4], 1
    %1541 = vsyncpa %s1540, 1

</llo_original>
